<compile_context>
chip_gen: v7x
topology: tpu7x:2x2x1
jax: 0.10.0
libtpu: 0.0.40
codegen_flags: <defaults>
</compile_context>

<pallas_src>
import functools

import jax
import jax.numpy as jnp
import numpy as np
from jax.experimental import pallas as pl
from jax.experimental.pallas import tpu as pltpu

EPS = 1e-5


def resblock_kernel(x_ref, b1_ref, b2_ref, g1_ref, be1_ref,
                    g2_ref, be2_ref, o_ref, pad_ref, *, C):
    # x_ref  : (N, H, W*C)     f32  lane-dense input (lane index = w*C + c)
    # bK_ref : (3*W*C, W*C)         stacked banded conv weights (bf16 or f32)
    # gK/beK : (1, W*C)        f32  BN gamma/beta pre-tiled across w
    # o_ref  : (N, H, W*C)     f32  lane-dense output
    # pad_ref: (N, H+2, W*C)        single reusable H-padded scratch
    N, H, WC = x_ref.shape
    NH = N * H
    W = WC // C
    inv_m = 1.0 / float(NH * W)          # BN uses biased variance over N*H*W

    # Channel-pooling matrix built in-kernel (zero HBM bytes): P[i, j] = 1 iff
    # lanes i and j hold the same channel (i % C == j % C).  One-time VPU
    # iota/compare; kept f32 so the BN statistics stay exact.
    li = jax.lax.broadcasted_iota(jnp.int32, (WC, WC), 0)
    lj = jax.lax.broadcasted_iota(jnp.int32, (WC, WC), 1)
    pool = ((li % C) == (lj % C)).astype(jnp.float32)

    # Zero only the two halo rows; the interior is fully overwritten below.
    pad_ref[:, 0:1, :] = jnp.zeros((N, 1, WC), pad_ref.dtype)
    pad_ref[:, H + 1:H + 2, :] = jnp.zeros((N, 1, WC), pad_ref.dtype)

    def conv3x3(b_ref):
        # One fused K = 3*W*C contraction: the three kernel-row taps are
        # concatenated along the lane axis and accumulated inside the MXU
        # (f32 accumulation).  Width-direction padding is encoded in the
        # banded weight matrix.
        operand = jnp.concatenate(
            [pad_ref[:, dy:dy + H, :].reshape(NH, WC) for dy in range(3)],
            axis=-1)
        return jnp.dot(operand, b_ref[...], preferred_element_type=jnp.float32)

    def batchnorm(y, gamma, beta):
        # Training-mode BN, one-pass stats.  sum / sum-of-squares are stacked
        # into one (2, W*C) operand so a single pooling matmul yields both the
        # per-channel mean and E[y^2], broadcast back to lane-dense form.
        s = jnp.sum(y, axis=0, keepdims=True)          # (1, W*C)
        ss = jnp.sum(y * y, axis=0, keepdims=True)     # (1, W*C)
        stats = jnp.dot(jnp.concatenate([s, ss], axis=0), pool,
                        preferred_element_type=jnp.float32) * inv_m
        mu = stats[0:1, :]
        var = jnp.maximum(stats[1:2, :] - mu * mu, 0.0)   # clamp one-pass var
        return (y - mu) * jax.lax.rsqrt(var + EPS) * gamma + beta

    # ---- conv1 -> bn1 -> relu ----
    # (conv bias omitted: a per-channel constant is exactly cancelled by the
    #  training-mode BN mean subtraction.)
    pad_ref[:, 1:H + 1, :] = x_ref[...].astype(pad_ref.dtype)
    h = jnp.maximum(batchnorm(conv3x3(b1_ref), g1_ref[...], be1_ref[...]), 0.0)

    # ---- conv2 -> bn2 -> +residual -> relu (reuse the padded scratch) ----
    # On the bf16 path the intermediate activation is rounded once here; this
    # extra rounding site is covered by the relaxed test below.
    pad_ref[:, 1:H + 1, :] = h.reshape(N, H, WC).astype(pad_ref.dtype)
    y2 = batchnorm(conv3x3(b2_ref), g2_ref[...], be2_ref[...])
    o_ref[...] = jnp.maximum(y2.reshape(N, H, WC) + x_ref[...], 0.0)


def _band_weights(w_oihw, W):
    """OIHW (C,C,3,3) -> (3*W*C, W*C) stacked banded weights (re-layout only).

    B[dy*W*C + wi*C + ci, w*C + co] = weight[co, ci, dy, dx] with
    dx = wi - w + 1, zero where dx is outside [0, 2] (encodes the
    width-direction 'same' padding).
    """
    C = w_oihw.shape[0]
    wgt = jnp.transpose(w_oihw, (2, 3, 1, 0)).astype(jnp.float32)   # kh,kw,ci,co
    shift = jnp.arange(W)[:, None] - jnp.arange(W)[None, :] + 1     # wi - w + 1
    valid = (shift >= 0) & (shift <= 2)
    idx = jnp.clip(shift, 0, 2)
    b = wgt[:, idx]                                  # (3, wi, w, ci, co)
    b = jnp.where(valid[None, :, :, None, None], b, 0.0)
    b = jnp.transpose(b, (0, 1, 3, 2, 4))            # (3, wi, ci, w, co)
    return b.reshape(3 * W * C, W * C)


def residual_block(x_nchw, params, *, mxu_dtype=jnp.bfloat16):
    """NCHW in/out wrapper; transposes + parameter re-layout are glue only.

    mxu_dtype: MXU operand dtype for the conv contractions.  bf16 is the
    default on ALL generations (v5e/v6e/v7x MXUs are natively bf16);
    accumulation, BN and residual math are f32 either way.  Pass jnp.float32
    for an (almost) exact path used in verification.
    """
    N, C, H, W = x_nchw.shape
    WC = W * C
    x = jnp.transpose(x_nchw, (0, 2, 3, 1)).reshape(N, H, WC).astype(jnp.float32)

    b1 = _band_weights(params["w1"], W).astype(mxu_dtype)
    b2 = _band_weights(params["w2"], W).astype(mxu_dtype)

    def lane_tile(v):  # (C,) -> (1, W*C) matching lane index w*C + c
        return jnp.tile(v.reshape(1, C).astype(jnp.float32), (1, W))

    g1, be1 = lane_tile(params["g1"]), lane_tile(params["be1"])
    g2, be2 = lane_tile(params["g2"]), lane_tile(params["be2"])
    # params["cb1"]/["cb2"] (conv biases) intentionally not passed:
    # training-mode BN subtracts the batch mean, cancelling them exactly.

    vmem = pl.BlockSpec(memory_space=pltpu.MemorySpace.VMEM)
    out = pl.pallas_call(
        functools.partial(resblock_kernel, C=C),
        out_shape=jax.ShapeDtypeStruct((N, H, WC), jnp.float32),
        in_specs=[vmem] * 7,
        out_specs=vmem,
        scratch_shapes=[pltpu.VMEM((N, H + 2, WC), mxu_dtype)],
    )(x, b1, b2, g1, be1, g2, be2)

    return jnp.transpose(out.reshape(N, H, W, C), (0, 3, 1, 2))  # back to NCHW


def residual_block_reference(x_nchw, params):
    """Plain-JAX reference (same math, XLA conv at HIGHEST precision)."""
    x = jnp.transpose(x_nchw, (0, 2, 3, 1)).astype(jnp.float32)

    def conv_bn(inp, w_oihw, cb, g, be):
        w = jnp.transpose(w_oihw, (2, 3, 1, 0)).astype(jnp.float32)
        y = jax.lax.conv_general_dilated(
            inp, w, window_strides=(1, 1), padding="SAME",
            dimension_numbers=("NHWC", "HWIO", "NHWC"),
            precision=jax.lax.Precision.HIGHEST) + cb
        mu = jnp.mean(y, axis=(0, 1, 2))
        var = jnp.var(y, axis=(0, 1, 2))
        return g * (y - mu) / jnp.sqrt(var + EPS) + be

    h = jax.nn.relu(conv_bn(x, params["w1"], params["cb1"],
                            params["g1"], params["be1"]))
    y2 = conv_bn(h, params["w2"], params["cb2"], params["g2"], params["be2"])
    out = jax.nn.relu(y2 + x)
    return jnp.transpose(out, (0, 3, 1, 2))


def make_params(key, channels):
    ks = jax.random.split(key, 8)
    C = channels
    return {
        "w1": 0.1 * jax.random.normal(ks[0], (C, C, 3, 3), jnp.float32),  # OIHW
        "cb1": 0.1 * jax.random.normal(ks[1], (C,), jnp.float32),
        "g1": jax.random.uniform(ks[2], (C,), jnp.float32, 0.5, 1.5),
        "be1": 0.1 * jax.random.normal(ks[3], (C,), jnp.float32),
        "w2": 0.1 * jax.random.normal(ks[4], (C, C, 3, 3), jnp.float32),
        "cb2": 0.1 * jax.random.normal(ks[5], (C,), jnp.float32),
        "g2": jax.random.uniform(ks[6], (C,), jnp.float32, 0.5, 1.5),
        "be2": 0.1 * jax.random.normal(ks[7], (C,), jnp.float32),
    }


if __name__ == "__main__":
    key = jax.random.PRNGKey(0)
    k_x, k_p = jax.random.split(key)

    N, C, H, W = 2, 8, 16, 16          # NCHW; W*C = 128 -> fully lane-dense
    x = jax.random.normal(k_x, (N, C, H, W), jnp.float32)
    params = make_params(k_p, C)

    ref = jax.block_until_ready(residual_block_reference(x, params))
    scale = float(np.max(np.abs(np.asarray(ref))))

    # Default fast path: bf16 MXU operands (all generations), f32 accumulation
    # and BN/residual math.  bf16 operand rounding -> aggregate error bound.
    out = jax.block_until_ready(residual_block(x, params))
    err = float(np.max(np.abs(np.asarray(out) - np.asarray(ref))))
    assert err <= 5e-2 * scale + 1e-3, f"bf16 path error too large: {err}"

    # f32-operand path: tight check validating the banded re-layout, fused-tap
    # contraction and one-pass BN math.
    out_f32 = jax.block_until_ready(
        residual_block(x, params, mxu_dtype=jnp.float32))
    np.testing.assert_allclose(np.asarray(out_f32), np.asarray(ref),
                               rtol=1e-3, atol=1e-3)

    print("KERNEL_OK")
</pallas_src>

<mosaic_0001>
module attributes {stable_mosaic.version = 11 : i64} {
  func.func @resblock_kernel(%arg0: memref<2x16x128xf32, #tpu.memory_space<vmem>>, %arg1: memref<384x128xbf16, #tpu.memory_space<vmem>>, %arg2: memref<384x128xbf16, #tpu.memory_space<vmem>>, %arg3: memref<1x128xf32, #tpu.memory_space<vmem>>, %arg4: memref<1x128xf32, #tpu.memory_space<vmem>>, %arg5: memref<1x128xf32, #tpu.memory_space<vmem>>, %arg6: memref<1x128xf32, #tpu.memory_space<vmem>>, %arg7: memref<2x16x128xf32, #tpu.memory_space<vmem>>, %arg8: memref<2x18x128xbf16, #tpu.memory_space<vmem>>) attributes {dimension_semantics = [], scalar_prefetch = 0 : i64, scratch_operands = 1 : i64, tpu.core_type = #tpu.core_type<tc>} {
    %0 = tpu.iota {dimensions = array<i32: 0>} : vector<128x128xi32>
    %1 = tpu.iota {dimensions = array<i32: 1>} : vector<128x128xi32>
    %c8_i32 = arith.constant 8 : i32
    %c0_i32 = arith.constant 0 : i32
    %2 = arith.cmpi eq, %c8_i32, %c0_i32 : i32
    %c1_i32 = arith.constant 1 : i32
    %3 = arith.select %2, %c1_i32, %c8_i32 : i32
    %4 = vector.broadcast %3 : i32 to vector<128x128xi32>
    %5 = arith.remsi %0, %4 : vector<128x128xi32>
    %c0_i32_0 = arith.constant 0 : i32
    %6 = vector.broadcast %c0_i32_0 : i32 to vector<128x128xi32>
    %7 = arith.cmpi ne, %5, %6 : vector<128x128xi32>
    %c0_i32_1 = arith.constant 0 : i32
    %8 = vector.broadcast %c0_i32_1 : i32 to vector<128x128xi32>
    %9 = arith.cmpi slt, %5, %8 : vector<128x128xi32>
    %c0_i32_2 = arith.constant 0 : i32
    %10 = arith.cmpi slt, %3, %c0_i32_2 : i32
    %11 = vector.broadcast %10 : i1 to vector<128x128xi1>
    %12 = vector.broadcast %11 : vector<128x128xi1> to vector<128x128xi1>
    %13 = arith.xori %9, %12 : vector<128x128xi1>
    %14 = arith.andi %13, %7 : vector<128x128xi1>
    %15 = vector.broadcast %3 : i32 to vector<128x128xi32>
    %16 = arith.addi %5, %15 : vector<128x128xi32>
    %17 = arith.select %14, %16, %5 : vector<128x128xi1>, vector<128x128xi32>
    %c8_i32_3 = arith.constant 8 : i32
    %c0_i32_4 = arith.constant 0 : i32
    %18 = arith.cmpi eq, %c8_i32_3, %c0_i32_4 : i32
    %c1_i32_5 = arith.constant 1 : i32
    %19 = arith.select %18, %c1_i32_5, %c8_i32_3 : i32
    %20 = vector.broadcast %19 : i32 to vector<128x128xi32>
    %21 = arith.remsi %1, %20 : vector<128x128xi32>
    %c0_i32_6 = arith.constant 0 : i32
    %22 = vector.broadcast %c0_i32_6 : i32 to vector<128x128xi32>
    %23 = arith.cmpi ne, %21, %22 : vector<128x128xi32>
    %c0_i32_7 = arith.constant 0 : i32
    %24 = vector.broadcast %c0_i32_7 : i32 to vector<128x128xi32>
    %25 = arith.cmpi slt, %21, %24 : vector<128x128xi32>
    %c0_i32_8 = arith.constant 0 : i32
    %26 = arith.cmpi slt, %19, %c0_i32_8 : i32
    %27 = vector.broadcast %26 : i1 to vector<128x128xi1>
    %28 = vector.broadcast %27 : vector<128x128xi1> to vector<128x128xi1>
    %29 = arith.xori %25, %28 : vector<128x128xi1>
    %30 = arith.andi %29, %23 : vector<128x128xi1>
    %31 = vector.broadcast %19 : i32 to vector<128x128xi32>
    %32 = arith.addi %21, %31 : vector<128x128xi32>
    %33 = arith.select %30, %32, %21 : vector<128x128xi1>, vector<128x128xi32>
    %34 = arith.cmpi eq, %17, %33 : vector<128x128xi32>
    %35 = arith.extui %34 : vector<128x128xi1> to vector<128x128xi32>
    %36 = arith.sitofp %35 : vector<128x128xi32> to vector<128x128xf32>
    %cst = arith.constant 0.000000e+00 : bf16
    %37 = vector.broadcast %cst : bf16 to vector<2x1x128xbf16>
    %c0 = arith.constant 0 : index
    %c0_9 = arith.constant 0 : index
    %c0_10 = arith.constant 0 : index
    %38 = vector.load %arg8[%c0, %c0_9, %c0_10] : memref<2x18x128xbf16, #tpu.memory_space<vmem>>, vector<2x1x128xbf16>
    tpu.vector_store %arg8[%c0, %c0_9, %c0_10], %37 {strides = array<i32>} : memref<2x18x128xbf16, #tpu.memory_space<vmem>>, vector<2x1x128xbf16>,
    %cst_11 = arith.constant 0.000000e+00 : bf16
    %39 = vector.broadcast %cst_11 : bf16 to vector<2x1x128xbf16>
    %c0_12 = arith.constant 0 : index
    %c17 = arith.constant 17 : index
    %c0_13 = arith.constant 0 : index
    %40 = vector.load %arg8[%c0_12, %c17, %c0_13] : memref<2x18x128xbf16, #tpu.memory_space<vmem>>, vector<2x1x128xbf16>
    tpu.vector_store %arg8[%c0_12, %c17, %c0_13], %39 {strides = array<i32>} : memref<2x18x128xbf16, #tpu.memory_space<vmem>>, vector<2x1x128xbf16>,
    %c0_14 = arith.constant 0 : index
    %c0_15 = arith.constant 0 : index
    %c0_16 = arith.constant 0 : index
    %41 = vector.load %arg0[%c0_14, %c0_15, %c0_16] : memref<2x16x128xf32, #tpu.memory_space<vmem>>, vector<2x16x128xf32>
    %42 = arith.truncf %41 : vector<2x16x128xf32> to vector<2x16x128xbf16>
    %c0_17 = arith.constant 0 : index
    %c1 = arith.constant 1 : index
    %c0_18 = arith.constant 0 : index
    %43 = vector.load %arg8[%c0_17, %c1, %c0_18] : memref<2x18x128xbf16, #tpu.memory_space<vmem>>, vector<2x16x128xbf16>
    tpu.vector_store %arg8[%c0_17, %c1, %c0_18], %42 {strides = array<i32>} : memref<2x18x128xbf16, #tpu.memory_space<vmem>>, vector<2x16x128xbf16>,
    %c0_19 = arith.constant 0 : index
    %c0_20 = arith.constant 0 : index
    %c0_21 = arith.constant 0 : index
    %44 = vector.load %arg8[%c0_19, %c0_20, %c0_21] : memref<2x18x128xbf16, #tpu.memory_space<vmem>>, vector<2x16x128xbf16>
    %45 = vector.shape_cast %44 : vector<2x16x128xbf16> to vector<32x128xbf16>
    %c0_22 = arith.constant 0 : index
    %c1_23 = arith.constant 1 : index
    %c0_24 = arith.constant 0 : index
    %46 = vector.load %arg8[%c0_22, %c1_23, %c0_24] : memref<2x18x128xbf16, #tpu.memory_space<vmem>>, vector<2x16x128xbf16>
    %47 = vector.shape_cast %46 : vector<2x16x128xbf16> to vector<32x128xbf16>
    %c0_25 = arith.constant 0 : index
    %c2 = arith.constant 2 : index
    %c0_26 = arith.constant 0 : index
    %48 = vector.load %arg8[%c0_25, %c2, %c0_26] : memref<2x18x128xbf16, #tpu.memory_space<vmem>>, vector<2x16x128xbf16>
    %49 = vector.shape_cast %48 : vector<2x16x128xbf16> to vector<32x128xbf16>
    %50 = tpu.concatenate %45, %47, %49 in 1 : vector<32x128xbf16>, vector<32x128xbf16>, vector<32x128xbf16> -> vector<32x384xbf16>
    %c0_27 = arith.constant 0 : index
    %c0_28 = arith.constant 0 : index
    %51 = vector.load %arg1[%c0_27, %c0_28] : memref<384x128xbf16, #tpu.memory_space<vmem>>, vector<384x128xbf16>
    %cst_29 = arith.constant dense<0.000000e+00> : vector<32x128xf32>
    %52 = tpu.matmul %50, %51, %cst_29 {dimension_numbers = #tpu.dot_dimension_numbers<[1], [0], [0], [1], [0, 0, 1, 1], [], []>} : vector<32x384xbf16>, vector<384x128xbf16>, vector<32x128xf32> -> vector<32x128xf32>
    %c0_30 = arith.constant 0 : index
    %c0_31 = arith.constant 0 : index
    %53 = vector.load %arg3[%c0_30, %c0_31] : memref<1x128xf32, #tpu.memory_space<vmem>>, vector<1x128xf32>
    %c0_32 = arith.constant 0 : index
    %c0_33 = arith.constant 0 : index
    %54 = vector.load %arg4[%c0_32, %c0_33] : memref<1x128xf32, #tpu.memory_space<vmem>>, vector<1x128xf32>
    %cst_34 = arith.constant dense<0.000000e+00> : vector<128xf32>
    %55 = vector.multi_reduction <add>, %52, %cst_34 [0] : vector<32x128xf32> to vector<128xf32>
    %56 = vector.shape_cast %55 : vector<128xf32> to vector<1x128xf32>
    %57 = arith.mulf %52, %52 : vector<32x128xf32>
    %cst_35 = arith.constant dense<0.000000e+00> : vector<128xf32>
    %58 = vector.multi_reduction <add>, %57, %cst_35 [0] : vector<32x128xf32> to vector<128xf32>
    %59 = vector.shape_cast %58 : vector<128xf32> to vector<1x128xf32>
    %60 = tpu.concatenate %56, %59 in 0 : vector<1x128xf32>, vector<1x128xf32> -> vector<2x128xf32>
    %cst_36 = arith.constant dense<0.000000e+00> : vector<2x128xf32>
    %61 = tpu.matmul %60, %36, %cst_36 {dimension_numbers = #tpu.dot_dimension_numbers<[1], [0], [0], [1], [0, 0, 1, 1], [], []>} : vector<2x128xf32>, vector<128x128xf32>, vector<2x128xf32> -> vector<2x128xf32>
    %cst_37 = arith.constant 0.001953125 : f32
    %62 = vector.broadcast %cst_37 : f32 to vector<2x128xf32>
    %63 = arith.mulf %61, %62 : vector<2x128xf32>
    %64 = vector.extract_strided_slice %63 {offsets = [0, 0], sizes = [1, 128], strides = [1, 1]} : vector<2x128xf32> to vector<1x128xf32>
    %65 = vector.extract_strided_slice %63 {offsets = [1, 0], sizes = [1, 128], strides = [1, 1]} : vector<2x128xf32> to vector<1x128xf32>
    %66 = arith.mulf %64, %64 : vector<1x128xf32>
    %67 = arith.subf %65, %66 : vector<1x128xf32>
    %cst_38 = arith.constant 0.000000e+00 : f32
    %68 = vector.broadcast %cst_38 : f32 to vector<1x128xf32>
    %69 = arith.maximumf %67, %68 : vector<1x128xf32>
    %70 = vector.broadcast %64 : vector<1x128xf32> to vector<32x128xf32>
    %71 = arith.subf %52, %70 : vector<32x128xf32>
    %cst_39 = arith.constant 9.99999974E-6 : f32
    %72 = vector.broadcast %cst_39 : f32 to vector<1x128xf32>
    %73 = arith.addf %69, %72 : vector<1x128xf32>
    %74 = math.rsqrt %73 : vector<1x128xf32>
    %75 = vector.broadcast %74 : vector<1x128xf32> to vector<32x128xf32>
    %76 = arith.mulf %71, %75 : vector<32x128xf32>
    %77 = vector.broadcast %53 : vector<1x128xf32> to vector<32x128xf32>
    %78 = arith.mulf %76, %77 : vector<32x128xf32>
    %79 = vector.broadcast %54 : vector<1x128xf32> to vector<32x128xf32>
    %80 = arith.addf %78, %79 : vector<32x128xf32>
    %cst_40 = arith.constant 0.000000e+00 : f32
    %81 = vector.broadcast %cst_40 : f32 to vector<32x128xf32>
    %82 = arith.maximumf %80, %81 : vector<32x128xf32>
    %83 = vector.shape_cast %82 : vector<32x128xf32> to vector<2x16x128xf32>
    %84 = arith.truncf %83 : vector<2x16x128xf32> to vector<2x16x128xbf16>
    %c0_41 = arith.constant 0 : index
    %c1_42 = arith.constant 1 : index
    %c0_43 = arith.constant 0 : index
    %85 = vector.load %arg8[%c0_41, %c1_42, %c0_43] : memref<2x18x128xbf16, #tpu.memory_space<vmem>>, vector<2x16x128xbf16>
    tpu.vector_store %arg8[%c0_41, %c1_42, %c0_43], %84 {strides = array<i32>} : memref<2x18x128xbf16, #tpu.memory_space<vmem>>, vector<2x16x128xbf16>,
    %c0_44 = arith.constant 0 : index
    %c0_45 = arith.constant 0 : index
    %c0_46 = arith.constant 0 : index
    %86 = vector.load %arg8[%c0_44, %c0_45, %c0_46] : memref<2x18x128xbf16, #tpu.memory_space<vmem>>, vector<2x16x128xbf16>
    %87 = vector.shape_cast %86 : vector<2x16x128xbf16> to vector<32x128xbf16>
    %c0_47 = arith.constant 0 : index
    %c1_48 = arith.constant 1 : index
    %c0_49 = arith.constant 0 : index
    %88 = vector.load %arg8[%c0_47, %c1_48, %c0_49] : memref<2x18x128xbf16, #tpu.memory_space<vmem>>, vector<2x16x128xbf16>
    %89 = vector.shape_cast %88 : vector<2x16x128xbf16> to vector<32x128xbf16>
    %c0_50 = arith.constant 0 : index
    %c2_51 = arith.constant 2 : index
    %c0_52 = arith.constant 0 : index
    %90 = vector.load %arg8[%c0_50, %c2_51, %c0_52] : memref<2x18x128xbf16, #tpu.memory_space<vmem>>, vector<2x16x128xbf16>
    %91 = vector.shape_cast %90 : vector<2x16x128xbf16> to vector<32x128xbf16>
    %92 = tpu.concatenate %87, %89, %91 in 1 : vector<32x128xbf16>, vector<32x128xbf16>, vector<32x128xbf16> -> vector<32x384xbf16>
    %c0_53 = arith.constant 0 : index
    %c0_54 = arith.constant 0 : index
    %93 = vector.load %arg2[%c0_53, %c0_54] : memref<384x128xbf16, #tpu.memory_space<vmem>>, vector<384x128xbf16>
    %cst_55 = arith.constant dense<0.000000e+00> : vector<32x128xf32>
    %94 = tpu.matmul %92, %93, %cst_55 {dimension_numbers = #tpu.dot_dimension_numbers<[1], [0], [0], [1], [0, 0, 1, 1], [], []>} : vector<32x384xbf16>, vector<384x128xbf16>, vector<32x128xf32> -> vector<32x128xf32>
    %c0_56 = arith.constant 0 : index
    %c0_57 = arith.constant 0 : index
    %95 = vector.load %arg5[%c0_56, %c0_57] : memref<1x128xf32, #tpu.memory_space<vmem>>, vector<1x128xf32>
    %c0_58 = arith.constant 0 : index
    %c0_59 = arith.constant 0 : index
    %96 = vector.load %arg6[%c0_58, %c0_59] : memref<1x128xf32, #tpu.memory_space<vmem>>, vector<1x128xf32>
    %cst_60 = arith.constant dense<0.000000e+00> : vector<128xf32>
    %97 = vector.multi_reduction <add>, %94, %cst_60 [0] : vector<32x128xf32> to vector<128xf32>
    %98 = vector.shape_cast %97 : vector<128xf32> to vector<1x128xf32>
    %99 = arith.mulf %94, %94 : vector<32x128xf32>
    %cst_61 = arith.constant dense<0.000000e+00> : vector<128xf32>
    %100 = vector.multi_reduction <add>, %99, %cst_61 [0] : vector<32x128xf32> to vector<128xf32>
    %101 = vector.shape_cast %100 : vector<128xf32> to vector<1x128xf32>
    %102 = tpu.concatenate %98, %101 in 0 : vector<1x128xf32>, vector<1x128xf32> -> vector<2x128xf32>
    %cst_62 = arith.constant dense<0.000000e+00> : vector<2x128xf32>
    %103 = tpu.matmul %102, %36, %cst_62 {dimension_numbers = #tpu.dot_dimension_numbers<[1], [0], [0], [1], [0, 0, 1, 1], [], []>} : vector<2x128xf32>, vector<128x128xf32>, vector<2x128xf32> -> vector<2x128xf32>
    %cst_63 = arith.constant 0.001953125 : f32
    %104 = vector.broadcast %cst_63 : f32 to vector<2x128xf32>
    %105 = arith.mulf %103, %104 : vector<2x128xf32>
    %106 = vector.extract_strided_slice %105 {offsets = [0, 0], sizes = [1, 128], strides = [1, 1]} : vector<2x128xf32> to vector<1x128xf32>
    %107 = vector.extract_strided_slice %105 {offsets = [1, 0], sizes = [1, 128], strides = [1, 1]} : vector<2x128xf32> to vector<1x128xf32>
    %108 = arith.mulf %106, %106 : vector<1x128xf32>
    %109 = arith.subf %107, %108 : vector<1x128xf32>
    %cst_64 = arith.constant 0.000000e+00 : f32
    %110 = vector.broadcast %cst_64 : f32 to vector<1x128xf32>
    %111 = arith.maximumf %109, %110 : vector<1x128xf32>
    %112 = vector.broadcast %106 : vector<1x128xf32> to vector<32x128xf32>
    %113 = arith.subf %94, %112 : vector<32x128xf32>
    %cst_65 = arith.constant 9.99999974E-6 : f32
    %114 = vector.broadcast %cst_65 : f32 to vector<1x128xf32>
    %115 = arith.addf %111, %114 : vector<1x128xf32>
    %116 = math.rsqrt %115 : vector<1x128xf32>
    %117 = vector.broadcast %116 : vector<1x128xf32> to vector<32x128xf32>
    %118 = arith.mulf %113, %117 : vector<32x128xf32>
    %119 = vector.broadcast %95 : vector<1x128xf32> to vector<32x128xf32>
    %120 = arith.mulf %118, %119 : vector<32x128xf32>
    %121 = vector.broadcast %96 : vector<1x128xf32> to vector<32x128xf32>
    %122 = arith.addf %120, %121 : vector<32x128xf32>
    %123 = vector.shape_cast %122 : vector<32x128xf32> to vector<2x16x128xf32>
    %c0_66 = arith.constant 0 : index
    %c0_67 = arith.constant 0 : index
    %c0_68 = arith.constant 0 : index
    %124 = vector.load %arg0[%c0_66, %c0_67, %c0_68] : memref<2x16x128xf32, #tpu.memory_space<vmem>>, vector<2x16x128xf32>
    %125 = arith.addf %123, %124 : vector<2x16x128xf32>
    %cst_69 = arith.constant 0.000000e+00 : f32
    %126 = vector.broadcast %cst_69 : f32 to vector<2x16x128xf32>
    %127 = arith.maximumf %125, %126 : vector<2x16x128xf32>
    %c0_70 = arith.constant 0 : index
    %c0_71 = arith.constant 0 : index
    %c0_72 = arith.constant 0 : index
    %128 = vector.load %arg7[%c0_70, %c0_71, %c0_72] : memref<2x16x128xf32, #tpu.memory_space<vmem>>, vector<2x16x128xf32>
    tpu.vector_store %arg7[%c0_70, %c0_71, %c0_72], %127 {strides = array<i32>} : memref<2x16x128xf32, #tpu.memory_space<vmem>>, vector<2x16x128xf32>,
    return
  }
}

</mosaic_0001>

<llo_original>
// kernel: tpu_custom_call.1
$region0: #{tpu_custom_call.1}
  #allocation0 [shape = 'u32[]', space=smem, size = 0x4, offset = 0x4, fixed_abs, tag = 'smem constant byte address 0x4 - core index']
  #allocation1 [shape = 'u32[144,128]{1,0:T(1,128)}', space=vmem, size = 0x12000, scoped, tag = 'internal scratch']
  #allocation2 [shape = 'bf16[2,18,128]{2,1,0:T(8,128)(2,1)}', space=vmem, size = 0x3000, scoped, tag = 'scratch operand']
  %s0 = inlined_call_operand.hbm [shape: f32[2,16,128], index: 0, kind: input, shape index: {}]
  %s1 = inlined_call_operand.hbm [shape: bf16[384,128], index: 1, kind: input, shape index: {}]
  %s2 = inlined_call_operand.hbm [shape: bf16[384,128], index: 2, kind: input, shape index: {}]
  %s3 = inlined_call_operand.vmem [shape: f32[1,128], index: 3, kind: input, shape index: {}]
  %s4 = inlined_call_operand.vmem [shape: f32[1,128], index: 4, kind: input, shape index: {}]
  %s5 = inlined_call_operand.vmem [shape: f32[1,128], index: 5, kind: input, shape index: {}]
  %s6 = inlined_call_operand.vmem [shape: f32[1,128], index: 6, kind: input, shape index: {}]
  %s7 = inlined_call_operand.hbm [shape: f32[2,16,128], index: 7, kind: output, shape index: {}]
  %s8 = sld [smem:[#allocation0]]
  $region50: #{tpu_custom_call.1} parent=0
    _
  %s10 = ssub.s32 1, %s8
  %s11 = scalar_select 0, %s10, %s8
  $region1: #{tpu_custom_call.1} parent=0
    #allocation3 [shape = 'u8[16384]{0}', space=vmem, size = 0x4000, scoped, tag = 'input window, operand 0, single buffered']
    #allocation4 [shape = 's32[1]{0}', space=sflag, size = 0x4, scoped, tag = 'scoped memory for tpu_custom_call.1']
    #allocation5 [shape = 's32[1]{0}', space=sflag, size = 0x4, scoped, tag = 'scoped memory for tpu_custom_call.1']
    #allocation6 [shape = 'u8[98304]{0}', space=vmem, size = 0x18000, scoped, tag = 'input window, operand 1, single buffered']
    #allocation7 [shape = 's32[1]{0}', space=sflag, size = 0x4, scoped, tag = 'scoped memory for tpu_custom_call.1']
    #allocation8 [shape = 'u8[98304]{0}', space=vmem, size = 0x18000, scoped, tag = 'input window, operand 2, single buffered']
    #allocation9 [shape = 'u8[16384]{0}', space=vmem, size = 0x4000, scoped, tag = 'output window, operand 0, single buffered']
    %12 = vsyncpa [#allocation4], 0
    %13 = vsyncpa [#allocation7], 0
    %14 = vsyncpa [#allocation5], 0
    // Predicated region
    $region2: #{tpu_custom_call.1} parent=1 // pred_check
      _
    $region3: #{tpu_custom_call.1} parent=1 // pred_check_branch
      %16 = sbr.rel (0) target = $region5
    $region4: #{tpu_custom_call.1} parent=1 // pred_region
      %s18 = ssub.s32 512, 512
      %19 = vsyncadd [#allocation4], %s18
      %s20 = sshll.u32 [#allocation3], 4
      %s21 = int_to_ptr.vmem [resolvable:$true] %s20
      %26 = dma.hbm_to_vmem [thread:$0]  %s0, 512, %s21, [#allocation4], 128, 128, 8
    $region5: #{tpu_custom_call.1} parent=1 // pred_fallthru
      _
    // Predicated region
    $region6: #{tpu_custom_call.1} parent=1 // pred_check
      _
    $region7: #{tpu_custom_call.1} parent=1 // pred_check_branch
      %28 = sbr.rel (0) target = $region9
    $region8: #{tpu_custom_call.1} parent=1 // pred_region
      %s30 = ssub.s32 3072, 3072
      %31 = vsyncadd [#allocation7], %s30
      %s32 = sshll.u32 [#allocation6], 4
      %s33 = int_to_ptr.vmem [resolvable:$true] %s32
      %38 = dma.hbm_to_vmem [thread:$0]  %s1, 3072, %s33, [#allocation7], 64, 64, 4
    $region9: #{tpu_custom_call.1} parent=1 // pred_fallthru
      _
    // Predicated region
    $region10: #{tpu_custom_call.1} parent=1 // pred_check
      _
    $region11: #{tpu_custom_call.1} parent=1 // pred_check_branch
      %40 = sbr.rel (0) target = $region13
    $region12: #{tpu_custom_call.1} parent=1 // pred_region
      %s42 = ssub.s32 3072, 3072
      %43 = vsyncadd [#allocation7], %s42
      %s44 = sshll.u32 [#allocation8], 4
      %s45 = int_to_ptr.vmem [resolvable:$true] %s44
      %50 = dma.hbm_to_vmem [thread:$0]  %s2, 3072, %s45, [#allocation7], 64, 64, 4
    $region13: #{tpu_custom_call.1} parent=1 // pred_fallthru
      _
    // Predicated region
    $region14: #{tpu_custom_call.1} parent=1 // pred_check
      _
    $region15: #{tpu_custom_call.1} parent=1 // pred_check_branch
      %52 = sbr.rel (0) target = $region17
    $region16: #{tpu_custom_call.1} parent=1 // pred_region
      _
    $region17: #{tpu_custom_call.1} parent=1 // pred_fallthru
      _
    // Predicated region
    $region18: #{tpu_custom_call.1} parent=1 // pred_check
      _
    $region19: #{tpu_custom_call.1} parent=1 // pred_check_branch
      %54 = sbr.rel (0) target = $region21
    $region20: #{tpu_custom_call.1} parent=1 // pred_region
      _
    $region21: #{tpu_custom_call.1} parent=1 // pred_fallthru
      _
    // Predicated region
    $region22: #{tpu_custom_call.1} parent=1 // pred_check
      _
    $region23: #{tpu_custom_call.1} parent=1 // pred_check_branch
      %56 = sbr.rel (0) target = $region25
    $region24: #{tpu_custom_call.1} parent=1 // pred_region
      _
    $region25: #{tpu_custom_call.1} parent=1 // pred_fallthru
      _
    // Predicated region
    $region26: #{tpu_custom_call.1} parent=1 // pred_check
      _
    $region27: #{tpu_custom_call.1} parent=1 // pred_check_branch
      %58 = sbr.rel (0) target = $region29
    $region28: #{tpu_custom_call.1} parent=1 // pred_region
      _
    $region29: #{tpu_custom_call.1} parent=1 // pred_fallthru
      _
    // Predicated region
    $region30: #{tpu_custom_call.1} parent=1 // pred_check
      _
    $region31: #{tpu_custom_call.1} parent=1 // pred_check_branch
      %60 = sbr.rel (0) target = $region33
    $region32: #{tpu_custom_call.1} parent=1 // pred_region
      %61 = dma.done [#allocation4], 512
    $region33: #{tpu_custom_call.1} parent=1 // pred_fallthru
      _
    // Predicated region
    $region34: #{tpu_custom_call.1} parent=1 // pred_check
      _
    $region35: #{tpu_custom_call.1} parent=1 // pred_check_branch
      %63 = sbr.rel (0) target = $region37
    $region36: #{tpu_custom_call.1} parent=1 // pred_region
      %64 = dma.done [#allocation7], 3072
    $region37: #{tpu_custom_call.1} parent=1 // pred_fallthru
      _
    // Predicated region
    $region38: #{tpu_custom_call.1} parent=1 // pred_check
      _
    $region39: #{tpu_custom_call.1} parent=1 // pred_check_branch
      %66 = sbr.rel (0) target = $region41
    $region40: #{tpu_custom_call.1} parent=1 // pred_region
      %67 = dma.done [#allocation7], 3072
    $region41: #{tpu_custom_call.1} parent=1 // pred_fallthru
      _
    %v69 = vlaneseq
    %v70 = vshrl.u32 %v69, 7
    %v71 = vadd.s32 %v70, 8
    %v72 = vadd.s32 %v70, 16
    %v73 = vadd.s32 %v70, 24
    %v74 = vadd.s32 %v70, 32
    %v75 = vadd.s32 %v70, 40
    %v76 = vadd.s32 %v70, 48
    %v77 = vadd.s32 %v70, 56
    %v78 = vadd.s32 %v70, 64
    %v79 = vadd.s32 %v70, 72
    %v80 = vadd.s32 %v70, 80
    %v81 = vadd.s32 %v70, 88
    %v82 = vadd.s32 %v70, 96
    %v83 = vadd.s32 %v70, 104
    %v84 = vadd.s32 %v70, 112
    %v85 = vadd.s32 %v70, 120
    %v86 = vlaneseq
    %v87 = vand.u32 %v86, 127
    %vm88 = vcmp.lt.s32.totalorder %v70, 0
    %v89 = vsub.s32 0, %v70
    %v90 = vsel %vm88, %v89, %v70
    %v91 = vshrl.u32 %v90, 3
    %v92 = vand.u32 %v90, 7
    %v93 = vsub.s32 0, %v92
    %v94 = vsel %vm88, %v93, %v92
    %vm95 = vcmp.lt.s32.totalorder %v71, 0
    %v96 = vsub.s32 0, %v71
    %v97 = vsel %vm95, %v96, %v71
    %v98 = vshrl.u32 %v97, 3
    %v99 = vand.u32 %v97, 7
    %v100 = vsub.s32 0, %v99
    %v101 = vsel %vm95, %v100, %v99
    %vm102 = vcmp.lt.s32.totalorder %v72, 0
    %v103 = vsub.s32 0, %v72
    %v104 = vsel %vm102, %v103, %v72
    %v105 = vshrl.u32 %v104, 3
    %v106 = vand.u32 %v104, 7
    %v107 = vsub.s32 0, %v106
    %v108 = vsel %vm102, %v107, %v106
    %vm109 = vcmp.lt.s32.totalorder %v73, 0
    %v110 = vsub.s32 0, %v73
    %v111 = vsel %vm109, %v110, %v73
    %v112 = vshrl.u32 %v111, 3
    %v113 = vand.u32 %v111, 7
    %v114 = vsub.s32 0, %v113
    %v115 = vsel %vm109, %v114, %v113
    %vm116 = vcmp.lt.s32.totalorder %v74, 0
    %v117 = vsub.s32 0, %v74
    %v118 = vsel %vm116, %v117, %v74
    %v119 = vshrl.u32 %v118, 3
    %v120 = vand.u32 %v118, 7
    %v121 = vsub.s32 0, %v120
    %v122 = vsel %vm116, %v121, %v120
    %vm123 = vcmp.lt.s32.totalorder %v75, 0
    %v124 = vsub.s32 0, %v75
    %v125 = vsel %vm123, %v124, %v75
    %v126 = vshrl.u32 %v125, 3
    %v127 = vand.u32 %v125, 7
    %v128 = vsub.s32 0, %v127
    %v129 = vsel %vm123, %v128, %v127
    %vm130 = vcmp.lt.s32.totalorder %v76, 0
    %v131 = vsub.s32 0, %v76
    %v132 = vsel %vm130, %v131, %v76
    %v133 = vshrl.u32 %v132, 3
    %v134 = vand.u32 %v132, 7
    %v135 = vsub.s32 0, %v134
    %v136 = vsel %vm130, %v135, %v134
    %vm137 = vcmp.lt.s32.totalorder %v77, 0
    %v138 = vsub.s32 0, %v77
    %v139 = vsel %vm137, %v138, %v77
    %v140 = vshrl.u32 %v139, 3
    %v141 = vand.u32 %v139, 7
    %v142 = vsub.s32 0, %v141
    %v143 = vsel %vm137, %v142, %v141
    %vm144 = vcmp.lt.s32.totalorder %v78, 0
    %v145 = vsub.s32 0, %v78
    %v146 = vsel %vm144, %v145, %v78
    %v147 = vshrl.u32 %v146, 3
    %v148 = vand.u32 %v146, 7
    %v149 = vsub.s32 0, %v148
    %v150 = vsel %vm144, %v149, %v148
    %vm151 = vcmp.lt.s32.totalorder %v79, 0
    %v152 = vsub.s32 0, %v79
    %v153 = vsel %vm151, %v152, %v79
    %v154 = vshrl.u32 %v153, 3
    %v155 = vand.u32 %v153, 7
    %v156 = vsub.s32 0, %v155
    %v157 = vsel %vm151, %v156, %v155
    %vm158 = vcmp.lt.s32.totalorder %v80, 0
    %v159 = vsub.s32 0, %v80
    %v160 = vsel %vm158, %v159, %v80
    %v161 = vshrl.u32 %v160, 3
    %v162 = vand.u32 %v160, 7
    %v163 = vsub.s32 0, %v162
    %v164 = vsel %vm158, %v163, %v162
    %vm165 = vcmp.lt.s32.totalorder %v81, 0
    %v166 = vsub.s32 0, %v81
    %v167 = vsel %vm165, %v166, %v81
    %v168 = vshrl.u32 %v167, 3
    %v169 = vand.u32 %v167, 7
    %v170 = vsub.s32 0, %v169
    %v171 = vsel %vm165, %v170, %v169
    %vm172 = vcmp.lt.s32.totalorder %v82, 0
    %v173 = vsub.s32 0, %v82
    %v174 = vsel %vm172, %v173, %v82
    %v175 = vshrl.u32 %v174, 3
    %v176 = vand.u32 %v174, 7
    %v177 = vsub.s32 0, %v176
    %v178 = vsel %vm172, %v177, %v176
    %vm179 = vcmp.lt.s32.totalorder %v83, 0
    %v180 = vsub.s32 0, %v83
    %v181 = vsel %vm179, %v180, %v83
    %v182 = vshrl.u32 %v181, 3
    %v183 = vand.u32 %v181, 7
    %v184 = vsub.s32 0, %v183
    %v185 = vsel %vm179, %v184, %v183
    %vm186 = vcmp.lt.s32.totalorder %v84, 0
    %v187 = vsub.s32 0, %v84
    %v188 = vsel %vm186, %v187, %v84
    %v189 = vshrl.u32 %v188, 3
    %v190 = vand.u32 %v188, 7
    %v191 = vsub.s32 0, %v190
    %v192 = vsel %vm186, %v191, %v190
    %vm193 = vcmp.lt.s32.totalorder %v85, 0
    %v194 = vsub.s32 0, %v85
    %v195 = vsel %vm193, %v194, %v85
    %v196 = vshrl.u32 %v195, 3
    %v197 = vand.u32 %v195, 7
    %v198 = vsub.s32 0, %v197
    %v199 = vsel %vm193, %v198, %v197
    %vm200 = vcmp.ne.s32.totalorder %v94, 0
    %vm201 = vcmp.ne.s32.totalorder %v101, 0
    %vm202 = vcmp.ne.s32.totalorder %v108, 0
    %vm203 = vcmp.ne.s32.totalorder %v115, 0
    %vm204 = vcmp.ne.s32.totalorder %v122, 0
    %vm205 = vcmp.ne.s32.totalorder %v129, 0
    %vm206 = vcmp.ne.s32.totalorder %v136, 0
    %vm207 = vcmp.ne.s32.totalorder %v143, 0
    %vm208 = vcmp.ne.s32.totalorder %v150, 0
    %vm209 = vcmp.ne.s32.totalorder %v157, 0
    %vm210 = vcmp.ne.s32.totalorder %v164, 0
    %vm211 = vcmp.ne.s32.totalorder %v171, 0
    %vm212 = vcmp.ne.s32.totalorder %v178, 0
    %vm213 = vcmp.ne.s32.totalorder %v185, 0
    %vm214 = vcmp.ne.s32.totalorder %v192, 0
    %vm215 = vcmp.ne.s32.totalorder %v199, 0
    %vm216 = vcmp.lt.s32.totalorder %v94, 0
    %vm217 = vcmp.lt.s32.totalorder %v101, 0
    %vm218 = vcmp.lt.s32.totalorder %v108, 0
    %vm219 = vcmp.lt.s32.totalorder %v115, 0
    %vm220 = vcmp.lt.s32.totalorder %v122, 0
    %vm221 = vcmp.lt.s32.totalorder %v129, 0
    %vm222 = vcmp.lt.s32.totalorder %v136, 0
    %vm223 = vcmp.lt.s32.totalorder %v143, 0
    %vm224 = vcmp.lt.s32.totalorder %v150, 0
    %vm225 = vcmp.lt.s32.totalorder %v157, 0
    %vm226 = vcmp.lt.s32.totalorder %v164, 0
    %vm227 = vcmp.lt.s32.totalorder %v171, 0
    %vm228 = vcmp.lt.s32.totalorder %v178, 0
    %vm229 = vcmp.lt.s32.totalorder %v185, 0
    %vm230 = vcmp.lt.s32.totalorder %v192, 0
    %vm231 = vcmp.lt.s32.totalorder %v199, 0
    %vm232 = vmand %vm216, %vm200
    %vm233 = vmand %vm217, %vm201
    %vm234 = vmand %vm218, %vm202
    %vm235 = vmand %vm219, %vm203
    %vm236 = vmand %vm220, %vm204
    %vm237 = vmand %vm221, %vm205
    %vm238 = vmand %vm222, %vm206
    %vm239 = vmand %vm223, %vm207
    %vm240 = vmand %vm224, %vm208
    %vm241 = vmand %vm225, %vm209
    %vm242 = vmand %vm226, %vm210
    %vm243 = vmand %vm227, %vm211
    %vm244 = vmand %vm228, %vm212
    %vm245 = vmand %vm229, %vm213
    %vm246 = vmand %vm230, %vm214
    %vm247 = vmand %vm231, %vm215
    %v248 = vadd.s32 %v94, 8
    %v249 = vadd.s32 %v101, 8
    %v250 = vadd.s32 %v108, 8
    %v251 = vadd.s32 %v115, 8
    %v252 = vadd.s32 %v122, 8
    %v253 = vadd.s32 %v129, 8
    %v254 = vadd.s32 %v136, 8
    %v255 = vadd.s32 %v143, 8
    %v256 = vadd.s32 %v150, 8
    %v257 = vadd.s32 %v157, 8
    %v258 = vadd.s32 %v164, 8
    %v259 = vadd.s32 %v171, 8
    %v260 = vadd.s32 %v178, 8
    %v261 = vadd.s32 %v185, 8
    %v262 = vadd.s32 %v192, 8
    %v263 = vadd.s32 %v199, 8
    %v264 = vsel %vm232, %v248, %v94
    %v265 = vsel %vm233, %v249, %v101
    %v266 = vsel %vm234, %v250, %v108
    %v267 = vsel %vm235, %v251, %v115
    %v268 = vsel %vm236, %v252, %v122
    %v269 = vsel %vm237, %v253, %v129
    %v270 = vsel %vm238, %v254, %v136
    %v271 = vsel %vm239, %v255, %v143
    %v272 = vsel %vm240, %v256, %v150
    %v273 = vsel %vm241, %v257, %v157
    %v274 = vsel %vm242, %v258, %v164
    %v275 = vsel %vm243, %v259, %v171
    %v276 = vsel %vm244, %v260, %v178
    %v277 = vsel %vm245, %v261, %v185
    %v278 = vsel %vm246, %v262, %v192
    %v279 = vsel %vm247, %v263, %v199
    %vm280 = vcmp.lt.s32.totalorder %v87, 0
    %v281 = vsub.s32 0, %v87
    %v282 = vsel %vm280, %v281, %v87
    %v283 = vshrl.u32 %v282, 3
    %v284 = vand.u32 %v282, 7
    %v285 = vsub.s32 0, %v284
    %v286 = vsel %vm280, %v285, %v284
    %vm287 = vcmp.ne.s32.totalorder %v286, 0
    %vm288 = vcmp.lt.s32.totalorder %v286, 0
    %vm289 = vmand %vm288, %vm287
    %v290 = vadd.s32 %v286, 8
    %v291 = vsel %vm289, %v290, %v286
    %vm292 = vcmp.eq.s32.totalorder %v264, %v291
    %vm293 = vcmp.eq.s32.totalorder %v265, %v291
    %vm294 = vcmp.eq.s32.totalorder %v266, %v291
    %vm295 = vcmp.eq.s32.totalorder %v267, %v291
    %vm296 = vcmp.eq.s32.totalorder %v268, %v291
    %vm297 = vcmp.eq.s32.totalorder %v269, %v291
    %vm298 = vcmp.eq.s32.totalorder %v270, %v291
    %vm299 = vcmp.eq.s32.totalorder %v271, %v291
    %vm300 = vcmp.eq.s32.totalorder %v272, %v291
    %vm301 = vcmp.eq.s32.totalorder %v273, %v291
    %vm302 = vcmp.eq.s32.totalorder %v274, %v291
    %vm303 = vcmp.eq.s32.totalorder %v275, %v291
    %vm304 = vcmp.eq.s32.totalorder %v276, %v291
    %vm305 = vcmp.eq.s32.totalorder %v277, %v291
    %vm306 = vcmp.eq.s32.totalorder %v278, %v291
    %vm307 = vcmp.eq.s32.totalorder %v279, %v291
    %v308 = vsel %vm292, 1, 0
    %v309 = vsel %vm293, 1, 0
    %v310 = vsel %vm294, 1, 0
    %v311 = vsel %vm295, 1, 0
    %v312 = vsel %vm296, 1, 0
    %v313 = vsel %vm297, 1, 0
    %v314 = vsel %vm298, 1, 0
    %v315 = vsel %vm299, 1, 0
    %v316 = vsel %vm300, 1, 0
    %v317 = vsel %vm301, 1, 0
    %v318 = vsel %vm302, 1, 0
    %v319 = vsel %vm303, 1, 0
    %v320 = vsel %vm304, 1, 0
    %v321 = vsel %vm305, 1, 0
    %v322 = vsel %vm306, 1, 0
    %v323 = vsel %vm307, 1, 0
    %v324 = vcvt.s32.f32 %v308
    %v325 = vcvt.s32.f32 %v309
    %v326 = vcvt.s32.f32 %v310
    %v327 = vcvt.s32.f32 %v311
    %v328 = vcvt.s32.f32 %v312
    %v329 = vcvt.s32.f32 %v313
    %v330 = vcvt.s32.f32 %v314
    %v331 = vcvt.s32.f32 %v315
    %v332 = vcvt.s32.f32 %v316
    %v333 = vcvt.s32.f32 %v317
    %v334 = vcvt.s32.f32 %v318
    %v335 = vcvt.s32.f32 %v319
    %v336 = vcvt.s32.f32 %v320
    %v337 = vcvt.s32.f32 %v321
    %v338 = vcvt.s32.f32 %v322
    %v339 = vcvt.s32.f32 %v323
    %vm340 = vcmask 1040384
    %vm341 = vsmask.f32 256
    %vm342 = vmand %vm340, %vm341
    %v343 = vld [vmem:[#allocation2] sm:$0x1]
    %v344 = vsel %vm342, 0, %v343
    %345 = vst [vmem:[#allocation2] sm:$0x1] %v344
    %v346 = vld [vmem:[#allocation2 + $0xc] sm:$0x1]
    %v347 = vsel %vm342, 0, %v346
    %348 = vst [vmem:[#allocation2 + $0xc] sm:$0x1] %v347
    %vm349 = vsmask.f32 7938
    %vm350 = vmand %vm340, %vm349
    %v351 = vld [vmem:[#allocation2 + $0x8] sm:$0x1]
    %v352 = vsel %vm350, 0, %v351
    %353 = vst [vmem:[#allocation2 + $0x8] sm:$0x1] %v352
    %v354 = vld [vmem:[#allocation2 + $0x14] sm:$0x1]
    %v355 = vsel %vm350, 0, %v354
    %356 = vst [vmem:[#allocation2 + $0x14] sm:$0x1] %v355
    %v357 = vld [vmem:[#allocation3] sm:$0xff]
    %v358 = vld [vmem:[#allocation3 + $0x8] sm:$0xff]
    %v359 = vld [vmem:[#allocation3 + $0x10] sm:$0xff]
    %v360 = vld [vmem:[#allocation3 + $0x18] sm:$0xff]
    %v361 = vpack.c.bf16 %v358, %v357
    %v362 = vpack.c.bf16 %v360, %v359
    %v365 = vunpack.c.l.b16 %v361
    %v366 = vunpack.c.h.b16 %v361
    %v367 = vunpack.c.l.b16 %v362
    %v368 = vunpack.c.h.b16 %v362
    %v369 = vpack.c.b16 %v365, %v365
    %v370 = vpack.c.b16 %v366, %v366
    %v371 = vpack.c.b16 %v367, %v367
    %v372 = vpack.c.b16 %v368, %v368
    %vm373 = vsmask.f32 4368
    %vm374 = vmor %vm341, %vm373
    %v376 = vshrl.u32 %v369, 16
    %v378 = vrot.slane %v376, 7
    %v379 = vshll.u32 %v369, 16
    %v381 = vor.u32 %v378, %v379
    %v382 = vrot.slane %v378, 4
    %v384 = vshrl.u32 %v370, 16
    %v386 = vrot.slane %v384, 7
    %v387 = vshll.u32 %v370, 16
    %v389 = vor.u32 %v386, %v387
    %v390 = vsel %vm374, %v382, %v389
    %v391 = vrot.slane %v386, 4
    %v393 = vshrl.u32 %v371, 16
    %v395 = vrot.slane %v393, 7
    %v396 = vshll.u32 %v371, 16
    %v398 = vor.u32 %v395, %v396
    %v399 = vrot.slane %v395, 4
    %v401 = vshrl.u32 %v372, 16
    %v403 = vrot.slane %v401, 7
    %v404 = vshll.u32 %v372, 16
    %v406 = vor.u32 %v403, %v404
    %v407 = vsel %vm374, %v399, %v406
    %v408 = vrot.slane %v403, 4
    %vm415 = vcmask 1043456
    %vm416 = vmand %vm415, %vm349
    %v417 = vld [vmem:[#allocation2] sm:$0xf]
    %v418 = vsel %vm416, %v381, %v417
    %419 = vst [vmem:[#allocation2] sm:$0xf] %v418
    %420 = vst [vmem:[#allocation2 + $0x4] sm:$0xf] %v390
    %v421 = vld [vmem:[#allocation2 + $0x8] sm:$0x1]
    %v422 = vsel %vm342, %v391, %v421
    %423 = vst [vmem:[#allocation2 + $0x8] sm:$0x1] %v422
    %v424 = vld [vmem:[#allocation2 + $0xc] sm:$0xf]
    %v425 = vsel %vm416, %v398, %v424
    %426 = vst [vmem:[#allocation2 + $0xc] sm:$0xf] %v425
    %427 = vst [vmem:[#allocation2 + $0x10] sm:$0xf] %v407
    %v428 = vld [vmem:[#allocation2 + $0x14] sm:$0x1]
    %v429 = vsel %vm342, %v408, %v428
    %430 = vst [vmem:[#allocation2 + $0x14] sm:$0x1] %v429
    %v431 = vld [vmem:[#allocation2] sm:$0xf]
    %v432 = vld [vmem:[#allocation2 + $0x4] sm:$0xf]
    %v433 = vld [vmem:[#allocation2 + $0xc] sm:$0xf]
    %v434 = vld [vmem:[#allocation2 + $0x10] sm:$0xf]
    %v435 = vld [vmem:[#allocation2 + $0x8] sm:$0x1]
    %v436 = vld [vmem:[#allocation2 + $0x14] sm:$0x1]
    %vm437 = vsmask.f32 3328
    %vm438 = vsmask.f32 7440
    %vm439 = vmor %vm437, %vm438
    %v441 = vshrl.u32 %v431, 16
    %v443 = vrot.slane %v441, 4
    %v444 = vshll.u32 %v431, 16
    %v446 = vrot.slane %v444, 5
    %v447 = vor.u32 %v443, %v446
    %v448 = vrot.slane %v447, 4
    %v450 = vshll.u32 %v432, 16
    %v452 = vrot.slane %v450, 5
    %v453 = vsel %vm439, %v448, %v452
    %v454 = vshrl.u32 %v432, 16
    %v456 = vrot.slane %v454, 4
    %v457 = vor.u32 %v456, %v452
    %v458 = vrot.slane %v457, 4
    %v460 = vshll.u32 %v435, 16
    %v462 = vrot.slane %v460, 5
    %v463 = vsel %vm439, %v458, %v462
    %v465 = vshrl.u32 %v433, 16
    %v467 = vrot.slane %v465, 4
    %v468 = vshll.u32 %v433, 16
    %v470 = vrot.slane %v468, 5
    %v471 = vor.u32 %v467, %v470
    %v472 = vrot.slane %v471, 4
    %v474 = vshll.u32 %v434, 16
    %v476 = vrot.slane %v474, 5
    %v477 = vsel %vm439, %v472, %v476
    %v478 = vshrl.u32 %v434, 16
    %v480 = vrot.slane %v478, 4
    %v481 = vor.u32 %v480, %v476
    %v482 = vrot.slane %v481, 4
    %v484 = vshll.u32 %v436, 16
    %v486 = vrot.slane %v484, 5
    %v487 = vsel %vm439, %v482, %v486
    %v488 = vld [vmem:[#allocation2] sm:$0xe]
    %v489 = vld [vmem:[#allocation2 + $0xc] sm:$0xe]
    %vm496 = vcmask 1042432
    %vm497 = vcmask 1046532
    %vm498 = vmor %vm496, %vm497
    %v499 = vrot.slane %v488, 5
    %v500 = vrot.slane %v499, 4
    %v501 = vrot.slane %v432, 5
    %v502 = vsel %vm498, %v500, %v501
    %v503 = vrot.slane %v501, 4
    %v504 = vrot.slane %v435, 5
    %v505 = vsel %vm498, %v503, %v504
    %v506 = vrot.slane %v489, 5
    %v507 = vrot.slane %v506, 4
    %v508 = vrot.slane %v434, 5
    %v509 = vsel %vm498, %v507, %v508
    %v510 = vrot.slane %v508, 4
    %v511 = vrot.slane %v436, 5
    %v512 = vsel %vm498, %v510, %v511
    %v515 = vunpack.c.l.b16 %v431
    %v516 = vunpack.c.l.b16 %v432
    %v517 = vunpack.c.l.b16 %v433
    %v518 = vunpack.c.l.b16 %v434
    %v519 = vpack.c.b16 %v516, %v515
    %v520 = vpack.c.b16 %v518, %v517
    %v523 = vunpack.c.l.b16 %v453
    %v524 = vunpack.c.l.b16 %v463
    %v525 = vunpack.c.l.b16 %v477
    %v526 = vunpack.c.l.b16 %v487
    %v527 = vpack.c.b16 %v524, %v523
    %v528 = vpack.c.b16 %v526, %v525
    %v531 = vunpack.c.l.b16 %v502
    %v532 = vunpack.c.l.b16 %v505
    %v533 = vunpack.c.l.b16 %v509
    %v534 = vunpack.c.l.b16 %v512
    %v535 = vpack.c.b16 %v532, %v531
    %v536 = vpack.c.b16 %v534, %v533
    %v539 = vld [vmem:[#allocation6] sm:$0xf]
    %v540 = vld [vmem:[#allocation6 + $0x4] sm:$0xf]
    %v541 = vld [vmem:[#allocation6 + $0x8] sm:$0xf]
    %v542 = vld [vmem:[#allocation6 + $0xc] sm:$0xf]
    %v543 = vld [vmem:[#allocation6 + $0x10] sm:$0xf]
    %v544 = vld [vmem:[#allocation6 + $0x14] sm:$0xf]
    %v545 = vld [vmem:[#allocation6 + $0x18] sm:$0xf]
    %v546 = vld [vmem:[#allocation6 + $0x1c] sm:$0xf]
    %v547 = vld [vmem:[#allocation6 + $0x20] sm:$0xf]
    %v548 = vld [vmem:[#allocation6 + $0x24] sm:$0xf]
    %v549 = vld [vmem:[#allocation6 + $0x28] sm:$0xf]
    %v550 = vld [vmem:[#allocation6 + $0x2c] sm:$0xf]
    %v551 = vld [vmem:[#allocation6 + $0x30] sm:$0xf]
    %v552 = vld [vmem:[#allocation6 + $0x34] sm:$0xf]
    %v553 = vld [vmem:[#allocation6 + $0x38] sm:$0xf]
    %v554 = vld [vmem:[#allocation6 + $0x3c] sm:$0xf]
    %v555 = vld [vmem:[#allocation6 + $0x40] sm:$0xf]
    %v556 = vld [vmem:[#allocation6 + $0x44] sm:$0xf]
    %v557 = vld [vmem:[#allocation6 + $0x48] sm:$0xf]
    %v558 = vld [vmem:[#allocation6 + $0x4c] sm:$0xf]
    %v559 = vld [vmem:[#allocation6 + $0x50] sm:$0xf]
    %v560 = vld [vmem:[#allocation6 + $0x54] sm:$0xf]
    %v561 = vld [vmem:[#allocation6 + $0x58] sm:$0xf]
    %v562 = vld [vmem:[#allocation6 + $0x5c] sm:$0xf]
    %v563 = vld [vmem:[#allocation6 + $0x60] sm:$0xf]
    %v564 = vld [vmem:[#allocation6 + $0x64] sm:$0xf]
    %v565 = vld [vmem:[#allocation6 + $0x68] sm:$0xf]
    %v566 = vld [vmem:[#allocation6 + $0x6c] sm:$0xf]
    %v567 = vld [vmem:[#allocation6 + $0x70] sm:$0xf]
    %v568 = vld [vmem:[#allocation6 + $0x74] sm:$0xf]
    %v569 = vld [vmem:[#allocation6 + $0x78] sm:$0xf]
    %v570 = vld [vmem:[#allocation6 + $0x7c] sm:$0xf]
    %v571 = vld [vmem:[#allocation6 + $0x80] sm:$0xf]
    %v572 = vld [vmem:[#allocation6 + $0x84] sm:$0xf]
    %v573 = vld [vmem:[#allocation6 + $0x88] sm:$0xf]
    %v574 = vld [vmem:[#allocation6 + $0x8c] sm:$0xf]
    %v575 = vld [vmem:[#allocation6 + $0x90] sm:$0xf]
    %v576 = vld [vmem:[#allocation6 + $0x94] sm:$0xf]
    %v577 = vld [vmem:[#allocation6 + $0x98] sm:$0xf]
    %v578 = vld [vmem:[#allocation6 + $0x9c] sm:$0xf]
    %v579 = vld [vmem:[#allocation6 + $0xa0] sm:$0xf]
    %v580 = vld [vmem:[#allocation6 + $0xa4] sm:$0xf]
    %v581 = vld [vmem:[#allocation6 + $0xa8] sm:$0xf]
    %v582 = vld [vmem:[#allocation6 + $0xac] sm:$0xf]
    %v583 = vld [vmem:[#allocation6 + $0xb0] sm:$0xf]
    %v584 = vld [vmem:[#allocation6 + $0xb4] sm:$0xf]
    %v585 = vld [vmem:[#allocation6 + $0xb8] sm:$0xf]
    %v586 = vld [vmem:[#allocation6 + $0xbc] sm:$0xf]
    %v635 = vunpack.c.l.b16 %v539
    %v636 = vunpack.c.l.b16 %v540
    %v637 = vunpack.c.l.b16 %v541
    %v638 = vunpack.c.l.b16 %v542
    %v639 = vunpack.c.l.b16 %v543
    %v640 = vunpack.c.l.b16 %v544
    %v641 = vunpack.c.l.b16 %v545
    %v642 = vunpack.c.l.b16 %v546
    %v643 = vunpack.c.l.b16 %v547
    %v644 = vunpack.c.l.b16 %v548
    %v645 = vunpack.c.l.b16 %v549
    %v646 = vunpack.c.l.b16 %v550
    %v647 = vunpack.c.l.b16 %v551
    %v648 = vunpack.c.l.b16 %v552
    %v649 = vunpack.c.l.b16 %v553
    %v650 = vunpack.c.l.b16 %v554
    %v651 = vunpack.c.l.b16 %v555
    %v652 = vunpack.c.l.b16 %v556
    %v653 = vunpack.c.l.b16 %v557
    %v654 = vunpack.c.l.b16 %v558
    %v655 = vunpack.c.l.b16 %v559
    %v656 = vunpack.c.l.b16 %v560
    %v657 = vunpack.c.l.b16 %v561
    %v658 = vunpack.c.l.b16 %v562
    %v659 = vunpack.c.l.b16 %v563
    %v660 = vunpack.c.l.b16 %v564
    %v661 = vunpack.c.l.b16 %v565
    %v662 = vunpack.c.l.b16 %v566
    %v663 = vunpack.c.l.b16 %v567
    %v664 = vunpack.c.l.b16 %v568
    %v665 = vunpack.c.l.b16 %v569
    %v666 = vunpack.c.l.b16 %v570
    %v667 = vunpack.c.l.b16 %v571
    %v668 = vunpack.c.l.b16 %v572
    %v669 = vunpack.c.l.b16 %v573
    %v670 = vunpack.c.l.b16 %v574
    %v671 = vunpack.c.l.b16 %v575
    %v672 = vunpack.c.l.b16 %v576
    %v673 = vunpack.c.l.b16 %v577
    %v674 = vunpack.c.l.b16 %v578
    %v675 = vunpack.c.l.b16 %v579
    %v676 = vunpack.c.l.b16 %v580
    %v677 = vunpack.c.l.b16 %v581
    %v678 = vunpack.c.l.b16 %v582
    %v679 = vunpack.c.l.b16 %v583
    %v680 = vunpack.c.l.b16 %v584
    %v681 = vunpack.c.l.b16 %v585
    %v682 = vunpack.c.l.b16 %v586
    %v683 = vpack.c.b16 %v636, %v635
    %v684 = vpack.c.b16 %v638, %v637
    %v685 = vpack.c.b16 %v640, %v639
    %v686 = vpack.c.b16 %v642, %v641
    %v687 = vpack.c.b16 %v644, %v643
    %v688 = vpack.c.b16 %v646, %v645
    %v689 = vpack.c.b16 %v648, %v647
    %v690 = vpack.c.b16 %v650, %v649
    %v691 = vpack.c.b16 %v652, %v651
    %v692 = vpack.c.b16 %v654, %v653
    %v693 = vpack.c.b16 %v656, %v655
    %v694 = vpack.c.b16 %v658, %v657
    %v695 = vpack.c.b16 %v660, %v659
    %v696 = vpack.c.b16 %v662, %v661
    %v697 = vpack.c.b16 %v664, %v663
    %v698 = vpack.c.b16 %v666, %v665
    %v699 = vpack.c.b16 %v668, %v667
    %v700 = vpack.c.b16 %v670, %v669
    %v701 = vpack.c.b16 %v672, %v671
    %v702 = vpack.c.b16 %v674, %v673
    %v703 = vpack.c.b16 %v676, %v675
    %v704 = vpack.c.b16 %v678, %v677
    %v705 = vpack.c.b16 %v680, %v679
    %v706 = vpack.c.b16 %v682, %v681
    %731 = vmatprep.subr.bf16.mxu0 0
    %732 = vmatpush1.bf16.msra.mxu0 %v683
    %733 = vmatprep.subr.bf16.mxu0 0
    %734 = vmatpush1.bf16.msra.mxu0 %v684
    %735 = vmatprep.subr.bf16.mxu0 0
    %736 = vmatpush1.bf16.msra.mxu0 %v685
    %737 = vmatprep.subr.bf16.mxu0 0
    %738 = vmatpush1.bf16.msra.mxu0 %v686
    %739 = vmatprep.subr.bf16.mxu0 0
    %740 = vmatpush1.bf16.msra.mxu0 %v687
    %741 = vmatprep.subr.bf16.mxu0 0
    %742 = vmatpush1.bf16.msra.mxu0 %v688
    %743 = vmatprep.subr.bf16.mxu0 0
    %744 = vmatpush1.bf16.msra.mxu0 %v689
    %745 = vmatprep.subr.bf16.mxu0 0
    %746 = vmatpush1.bf16.msra.mxu0 %v690
    %747 = vmatprep.subr.bf16.mxu0 0
    %748 = vmatpush1.bf16.msra.mxu0 %v691
    %749 = vmatprep.subr.bf16.mxu0 0
    %750 = vmatpush1.bf16.msra.mxu0 %v692
    %751 = vmatprep.subr.bf16.mxu0 0
    %752 = vmatpush1.bf16.msra.mxu0 %v693
    %753 = vmatprep.subr.bf16.mxu0 0
    %754 = vmatpush1.bf16.msra.mxu0 %v694
    %755 = vmatprep.subr.bf16.mxu0 0
    %756 = vmatpush1.bf16.msra.mxu0 %v695
    %757 = vmatprep.subr.bf16.mxu0 0
    %758 = vmatpush1.bf16.msra.mxu0 %v696
    %759 = vmatprep.subr.bf16.mxu0 0
    %760 = vmatpush1.bf16.msra.mxu0 %v697
    %761 = vmatprep.subr.bf16.mxu0 0
    %762 = vmatpush1.bf16.msra.mxu0 %v698
    %763 = vmatprep.mubr.bf16.mxu0 %v527
    %764 = vmatmul.mubr.bf16.gmra.mrb[0].mxu0 %v519
    %v765 = vpop.f32.mrb[0].mxu0
    %v766 = vadd.f32 0.0, %v765
    %v767 = vpop.f32.mrb[0].mxu0
    %v768 = vpop.f32.mrb[0].mxu0
    %v769 = vadd.f32 0.0, %v768
    %v770 = vpop.f32.mrb[0].mxu0
    %771 = vmatprep.mubr.bf16.mxu0 %v528
    %772 = vmatmul.mubr.bf16.gmra.mrb[0].mxu0 %v520
    %v773 = vpop.f32.mrb[0].mxu0
    %v774 = vadd.f32 0.0, %v773
    %v775 = vpop.f32.mrb[0].mxu0
    %v776 = vpop.f32.mrb[0].mxu0
    %v777 = vadd.f32 0.0, %v776
    %v778 = vpop.f32.mrb[0].mxu0
    %779 = vdwg.mxu0
    %780 = vmatprep.subr.bf16.mxu0 0
    %781 = vmatpush1.bf16.msra.mxu0 %v699
    %782 = vmatprep.subr.bf16.mxu0 0
    %783 = vmatpush1.bf16.msra.mxu0 %v700
    %784 = vmatprep.subr.bf16.mxu0 0
    %785 = vmatpush1.bf16.msra.mxu0 %v701
    %786 = vmatprep.subr.bf16.mxu0 0
    %787 = vmatpush1.bf16.msra.mxu0 %v702
    %788 = vmatprep.subr.bf16.mxu0 0
    %789 = vmatpush1.bf16.msra.mxu0 %v703
    %790 = vmatprep.subr.bf16.mxu0 0
    %791 = vmatpush1.bf16.msra.mxu0 %v704
    %792 = vmatprep.subr.bf16.mxu0 0
    %793 = vmatpush1.bf16.msra.mxu0 %v705
    %794 = vmatprep.subr.bf16.mxu0 0
    %795 = vmatpush1.bf16.msra.mxu0 %v706
    %796 = vmatprep.subr.bf16.mxu0 0
    %797 = vmatpush1.bf16.msra.mxu0 0
    %798 = vmatprep.subr.bf16.mxu0 0
    %799 = vmatpush1.bf16.msra.mxu0 0
    %800 = vmatprep.subr.bf16.mxu0 0
    %801 = vmatpush1.bf16.msra.mxu0 0
    %802 = vmatprep.subr.bf16.mxu0 0
    %803 = vmatpush1.bf16.msra.mxu0 0
    %804 = vmatprep.subr.bf16.mxu0 0
    %805 = vmatpush1.bf16.msra.mxu0 0
    %806 = vmatprep.subr.bf16.mxu0 0
    %807 = vmatpush1.bf16.msra.mxu0 0
    %808 = vmatprep.subr.bf16.mxu0 0
    %809 = vmatpush1.bf16.msra.mxu0 0
    %810 = vmatprep.subr.bf16.mxu0 0
    %811 = vmatpush1.bf16.msra.mxu0 0
    %812 = vmatprep.mubr.bf16.mxu0 0
    %813 = vmatmul.mubr.bf16.gmra.mrb[0].mxu0 %v535
    %v814 = vpop.f32.mrb[0].mxu0
    %v815 = vadd.f32 %v766, %v814
    %v816 = vpop.f32.mrb[0].mxu0
    %v817 = vpop.f32.mrb[0].mxu0
    %v818 = vadd.f32 %v769, %v817
    %v819 = vpop.f32.mrb[0].mxu0
    %820 = vmatprep.mubr.bf16.mxu0 0
    %821 = vmatmul.mubr.bf16.gmra.mrb[0].mxu0 %v536
    %v822 = vpop.f32.mrb[0].mxu0
    %v823 = vadd.f32 %v774, %v822
    %v824 = vpop.f32.mrb[0].mxu0
    %v825 = vpop.f32.mrb[0].mxu0
    %v826 = vadd.f32 %v777, %v825
    %v827 = vpop.f32.mrb[0].mxu0
    %828 = vdwg.mxu0
    %v829 = vld [vmem:[%s3] sm:$0x1]
    %v830 = vld [vmem:[%s4] sm:$0x1]
    %v831 = vadd.f32 %v815, %v818
    %v832 = vadd.f32 %v831, %v823
    %v833 = vadd.f32 %v832, %v826
    %v834 = vrot.slane %v833, 4
    %v835 = vadd.f32 %v833, %v834
    %v836 = vrot.slane %v835, 2
    %v837 = vadd.f32 %v835, %v836
    %v838 = vrot.slane %v837, 1
    %v839 = vadd.f32 %v837, %v838
    %v840 = vmul.f32 %v815, %v815
    %v841 = vmul.f32 %v818, %v818
    %v842 = vmul.f32 %v823, %v823
    %v843 = vmul.f32 %v826, %v826
    %v844 = vadd.f32 %v840, %v841
    %v845 = vadd.f32 %v844, %v842
    %v846 = vadd.f32 %v845, %v843
    %v847 = vrot.slane %v846, 4
    %v848 = vadd.f32 %v846, %v847
    %v849 = vrot.slane %v848, 2
    %v850 = vadd.f32 %v848, %v849
    %v851 = vrot.slane %v850, 1
    %v852 = vadd.f32 %v850, %v851
    %vm853 = vcmask 1040384
    %v854 = vsel %vm853, %v839, %v852
    %855 = vmatprep.subr.mxu0 0.0
    %856 = vmatpush1.msra.mxu0 %v324
    %857 = vmatprep.subr.mxu0 0.0
    %858 = vmatpush1.msra.mxu0 %v325
    %859 = vmatprep.subr.mxu0 0.0
    %860 = vmatpush1.msra.mxu0 %v326
    %861 = vmatprep.subr.mxu0 0.0
    %862 = vmatpush1.msra.mxu0 %v327
    %863 = vmatprep.subr.mxu0 0.0
    %864 = vmatpush1.msra.mxu0 %v328
    %865 = vmatprep.subr.mxu0 0.0
    %866 = vmatpush1.msra.mxu0 %v329
    %867 = vmatprep.subr.mxu0 0.0
    %868 = vmatpush1.msra.mxu0 %v330
    %869 = vmatprep.subr.mxu0 0.0
    %870 = vmatpush1.msra.mxu0 %v331
    %871 = vmatprep.subr.mxu0 0.0
    %872 = vmatpush1.msra.mxu0 %v332
    %873 = vmatprep.subr.mxu0 0.0
    %874 = vmatpush1.msra.mxu0 %v333
    %875 = vmatprep.subr.mxu0 0.0
    %876 = vmatpush1.msra.mxu0 %v334
    %877 = vmatprep.subr.mxu0 0.0
    %878 = vmatpush1.msra.mxu0 %v335
    %879 = vmatprep.subr.mxu0 0.0
    %880 = vmatpush1.msra.mxu0 %v336
    %881 = vmatprep.subr.mxu0 0.0
    %882 = vmatpush1.msra.mxu0 %v337
    %883 = vmatprep.subr.mxu0 0.0
    %884 = vmatpush1.msra.mxu0 %v338
    %885 = vmatprep.subr.mxu0 0.0
    %886 = vmatpush1.msra.mxu0 %v339
    %887 = vmatprep.subr.mxu0 0.0
    %888 = vmatpush1.msra.mxu0 0.0
    %889 = vmatprep.subr.mxu0 0.0
    %890 = vmatpush1.msra.mxu0 0.0
    %891 = vmatprep.subr.mxu0 0.0
    %892 = vmatpush1.msra.mxu0 0.0
    %893 = vmatprep.subr.mxu0 0.0
    %894 = vmatpush1.msra.mxu0 0.0
    %895 = vmatprep.subr.mxu0 0.0
    %896 = vmatpush1.msra.mxu0 0.0
    %897 = vmatprep.subr.mxu0 0.0
    %898 = vmatpush1.msra.mxu0 0.0
    %899 = vmatprep.subr.mxu0 0.0
    %900 = vmatpush1.msra.mxu0 0.0
    %901 = vmatprep.subr.mxu0 0.0
    %902 = vmatpush1.msra.mxu0 0.0
    %903 = vmatprep.subr.mxu0 0.0
    %904 = vmatpush1.msra.mxu0 0.0
    %905 = vmatprep.subr.mxu0 0.0
    %906 = vmatpush1.msra.mxu0 0.0
    %907 = vmatprep.subr.mxu0 0.0
    %908 = vmatpush1.msra.mxu0 0.0
    %909 = vmatprep.subr.mxu0 0.0
    %910 = vmatpush1.msra.mxu0 0.0
    %911 = vmatprep.subr.mxu0 0.0
    %912 = vmatpush1.msra.mxu0 0.0
    %913 = vmatprep.subr.mxu0 0.0
    %914 = vmatpush1.msra.mxu0 0.0
    %915 = vmatprep.subr.mxu0 0.0
    %916 = vmatpush1.msra.mxu0 0.0
    %917 = vmatprep.subr.mxu0 0.0
    %918 = vmatpush1.msra.mxu0 0.0
    %919 = vmatprep.mubr.f32.mxu0 0.0
    %920 = vmatmul.mubr.f32.gmra.mrb[0].mxu0 %v854
    %v921 = vpop.f32.mrb[0].mxu0
    %v922 = vadd.f32 0.0, %v921
    %v923 = vpop.f32.mrb[0].mxu0
    %924 = vdwg.mxu0
    %v925 = vmul.f32 %v922, 0.001953125
    %v926 = vmul.f32 %v925, %v925
    %v928 = vrot.slane %v926, 7
    %v930 = vsub.f32 %v925, %v928
    %v931 = vmax.f32 %v930, 0.0
    %v932 = vlaneseq
    %v933 = vshrl.u32 %v932, 7
    %v934 = vsub.s32 0, %v933
    %v935 = vrot.slane %v925, %v934
    %v936 = vsub.f32 %v815, %v935
    %v937 = vsub.f32 %v818, %v935
    %v938 = vsub.f32 %v823, %v935
    %v939 = vsub.f32 %v826, %v935
    %v940 = vadd.f32 %v931, 1e-05
    %v941 = vrsqrt.pop %v940
    %v942 = vlaneseq
    %v943 = vshrl.u32 %v942, 7
    %v944 = vsub.s32 1, %v943
    %v945 = vrot.slane %v941, %v944
    %v946 = vmul.f32 %v936, %v945
    %v947 = vmul.f32 %v937, %v945
    %v948 = vmul.f32 %v938, %v945
    %v949 = vmul.f32 %v939, %v945
    %v951 = vlaneseq
    %v952 = vshrl.u32 %v951, 7
    %v953 = vsub.s32 0, %v952
    %v954 = vrot.slane %v829, %v953
    %v956 = vmul.f32 %v946, %v954
    %v957 = vmul.f32 %v947, %v954
    %v958 = vmul.f32 %v948, %v954
    %v959 = vmul.f32 %v949, %v954
    %v961 = vlaneseq
    %v962 = vshrl.u32 %v961, 7
    %v963 = vsub.s32 0, %v962
    %v964 = vrot.slane %v830, %v963
    %v966 = vadd.f32 %v956, %v964
    %v967 = vadd.f32 %v957, %v964
    %v968 = vadd.f32 %v958, %v964
    %v969 = vadd.f32 %v959, %v964
    %v970 = vmax.f32 %v966, 0.0
    %v971 = vmax.f32 %v967, 0.0
    %v972 = vmax.f32 %v968, 0.0
    %v973 = vmax.f32 %v969, 0.0
    %v974 = vpack.c.bf16 %v971, %v970
    %v975 = vpack.c.bf16 %v973, %v972
    %v978 = vunpack.c.l.b16 %v974
    %v979 = vunpack.c.h.b16 %v974
    %v980 = vunpack.c.l.b16 %v975
    %v981 = vunpack.c.h.b16 %v975
    %v982 = vpack.c.b16 %v978, %v978
    %v983 = vpack.c.b16 %v979, %v979
    %v984 = vpack.c.b16 %v980, %v980
    %v985 = vpack.c.b16 %v981, %v981
    %v987 = vshrl.u32 %v982, 16
    %v989 = vrot.slane %v987, 7
    %v990 = vshll.u32 %v982, 16
    %v992 = vor.u32 %v989, %v990
    %v993 = vrot.slane %v989, 4
    %v995 = vshrl.u32 %v983, 16
    %v997 = vrot.slane %v995, 7
    %v998 = vshll.u32 %v983, 16
    %v1000 = vor.u32 %v997, %v998
    %v1001 = vsel %vm374, %v993, %v1000
    %v1002 = vrot.slane %v997, 4
    %v1004 = vshrl.u32 %v984, 16
    %v1006 = vrot.slane %v1004, 7
    %v1007 = vshll.u32 %v984, 16
    %v1009 = vor.u32 %v1006, %v1007
    %v1010 = vrot.slane %v1006, 4
    %v1012 = vshrl.u32 %v985, 16
    %v1014 = vrot.slane %v1012, 7
    %v1015 = vshll.u32 %v985, 16
    %v1017 = vor.u32 %v1014, %v1015
    %v1018 = vsel %vm374, %v1010, %v1017
    %v1019 = vrot.slane %v1014, 4
    %v1026 = vsel %vm416, %v992, %v431
    %1027 = vst [vmem:[#allocation2] sm:$0xf] %v1026
    %1028 = vst [vmem:[#allocation2 + $0x4] sm:$0xf] %v1001
    %v1029 = vld [vmem:[#allocation2 + $0x8] sm:$0x1]
    %v1030 = vsel %vm342, %v1002, %v1029
    %1031 = vst [vmem:[#allocation2 + $0x8] sm:$0x1] %v1030
    %v1032 = vld [vmem:[#allocation2 + $0xc] sm:$0xf]
    %v1033 = vsel %vm416, %v1009, %v1032
    %1034 = vst [vmem:[#allocation2 + $0xc] sm:$0xf] %v1033
    %1035 = vst [vmem:[#allocation2 + $0x10] sm:$0xf] %v1018
    %v1036 = vld [vmem:[#allocation2 + $0x14] sm:$0x1]
    %v1037 = vsel %vm342, %v1019, %v1036
    %1038 = vst [vmem:[#allocation2 + $0x14] sm:$0x1] %v1037
    %v1039 = vld [vmem:[#allocation2] sm:$0xf]
    %v1040 = vld [vmem:[#allocation2 + $0x4] sm:$0xf]
    %v1041 = vld [vmem:[#allocation2 + $0xc] sm:$0xf]
    %v1042 = vld [vmem:[#allocation2 + $0x10] sm:$0xf]
    %v1043 = vld [vmem:[#allocation2 + $0x8] sm:$0x1]
    %v1044 = vld [vmem:[#allocation2 + $0x14] sm:$0x1]
    %v1046 = vshrl.u32 %v1039, 16
    %v1048 = vrot.slane %v1046, 4
    %v1049 = vshll.u32 %v1039, 16
    %v1051 = vrot.slane %v1049, 5
    %v1052 = vor.u32 %v1048, %v1051
    %v1053 = vrot.slane %v1052, 4
    %v1055 = vshll.u32 %v1040, 16
    %v1057 = vrot.slane %v1055, 5
    %v1058 = vsel %vm439, %v1053, %v1057
    %v1059 = vshrl.u32 %v1040, 16
    %v1061 = vrot.slane %v1059, 4
    %v1062 = vor.u32 %v1061, %v1057
    %v1063 = vrot.slane %v1062, 4
    %v1065 = vshll.u32 %v1043, 16
    %v1067 = vrot.slane %v1065, 5
    %v1068 = vsel %vm439, %v1063, %v1067
    %v1070 = vshrl.u32 %v1041, 16
    %v1072 = vrot.slane %v1070, 4
    %v1073 = vshll.u32 %v1041, 16
    %v1075 = vrot.slane %v1073, 5
    %v1076 = vor.u32 %v1072, %v1075
    %v1077 = vrot.slane %v1076, 4
    %v1079 = vshll.u32 %v1042, 16
    %v1081 = vrot.slane %v1079, 5
    %v1082 = vsel %vm439, %v1077, %v1081
    %v1083 = vshrl.u32 %v1042, 16
    %v1085 = vrot.slane %v1083, 4
    %v1086 = vor.u32 %v1085, %v1081
    %v1087 = vrot.slane %v1086, 4
    %v1089 = vshll.u32 %v1044, 16
    %v1091 = vrot.slane %v1089, 5
    %v1092 = vsel %vm439, %v1087, %v1091
    %v1093 = vld [vmem:[#allocation2] sm:$0xe]
    %v1094 = vld [vmem:[#allocation2 + $0xc] sm:$0xe]
    %v1101 = vrot.slane %v1093, 5
    %v1102 = vrot.slane %v1101, 4
    %v1103 = vrot.slane %v1040, 5
    %v1104 = vsel %vm498, %v1102, %v1103
    %v1105 = vrot.slane %v1103, 4
    %v1106 = vrot.slane %v1043, 5
    %v1107 = vsel %vm498, %v1105, %v1106
    %v1108 = vrot.slane %v1094, 5
    %v1109 = vrot.slane %v1108, 4
    %v1110 = vrot.slane %v1042, 5
    %v1111 = vsel %vm498, %v1109, %v1110
    %v1112 = vrot.slane %v1110, 4
    %v1113 = vrot.slane %v1044, 5
    %v1114 = vsel %vm498, %v1112, %v1113
    %v1117 = vunpack.c.l.b16 %v1039
    %v1118 = vunpack.c.l.b16 %v1040
    %v1119 = vunpack.c.l.b16 %v1041
    %v1120 = vunpack.c.l.b16 %v1042
    %v1121 = vpack.c.b16 %v1118, %v1117
    %v1122 = vpack.c.b16 %v1120, %v1119
    %v1125 = vunpack.c.l.b16 %v1058
    %v1126 = vunpack.c.l.b16 %v1068
    %v1127 = vunpack.c.l.b16 %v1082
    %v1128 = vunpack.c.l.b16 %v1092
    %v1129 = vpack.c.b16 %v1126, %v1125
    %v1130 = vpack.c.b16 %v1128, %v1127
    %v1133 = vunpack.c.l.b16 %v1104
    %v1134 = vunpack.c.l.b16 %v1107
    %v1135 = vunpack.c.l.b16 %v1111
    %v1136 = vunpack.c.l.b16 %v1114
    %v1137 = vpack.c.b16 %v1134, %v1133
    %v1138 = vpack.c.b16 %v1136, %v1135
    %v1141 = vld [vmem:[#allocation8] sm:$0xf]
    %v1142 = vld [vmem:[#allocation8 + $0x4] sm:$0xf]
    %v1143 = vld [vmem:[#allocation8 + $0x8] sm:$0xf]
    %v1144 = vld [vmem:[#allocation8 + $0xc] sm:$0xf]
    %v1145 = vld [vmem:[#allocation8 + $0x10] sm:$0xf]
    %v1146 = vld [vmem:[#allocation8 + $0x14] sm:$0xf]
    %v1147 = vld [vmem:[#allocation8 + $0x18] sm:$0xf]
    %v1148 = vld [vmem:[#allocation8 + $0x1c] sm:$0xf]
    %v1149 = vld [vmem:[#allocation8 + $0x20] sm:$0xf]
    %v1150 = vld [vmem:[#allocation8 + $0x24] sm:$0xf]
    %v1151 = vld [vmem:[#allocation8 + $0x28] sm:$0xf]
    %v1152 = vld [vmem:[#allocation8 + $0x2c] sm:$0xf]
    %v1153 = vld [vmem:[#allocation8 + $0x30] sm:$0xf]
    %v1154 = vld [vmem:[#allocation8 + $0x34] sm:$0xf]
    %v1155 = vld [vmem:[#allocation8 + $0x38] sm:$0xf]
    %v1156 = vld [vmem:[#allocation8 + $0x3c] sm:$0xf]
    %v1157 = vld [vmem:[#allocation8 + $0x40] sm:$0xf]
    %v1158 = vld [vmem:[#allocation8 + $0x44] sm:$0xf]
    %v1159 = vld [vmem:[#allocation8 + $0x48] sm:$0xf]
    %v1160 = vld [vmem:[#allocation8 + $0x4c] sm:$0xf]
    %v1161 = vld [vmem:[#allocation8 + $0x50] sm:$0xf]
    %v1162 = vld [vmem:[#allocation8 + $0x54] sm:$0xf]
    %v1163 = vld [vmem:[#allocation8 + $0x58] sm:$0xf]
    %v1164 = vld [vmem:[#allocation8 + $0x5c] sm:$0xf]
    %v1165 = vld [vmem:[#allocation8 + $0x60] sm:$0xf]
    %v1166 = vld [vmem:[#allocation8 + $0x64] sm:$0xf]
    %v1167 = vld [vmem:[#allocation8 + $0x68] sm:$0xf]
    %v1168 = vld [vmem:[#allocation8 + $0x6c] sm:$0xf]
    %v1169 = vld [vmem:[#allocation8 + $0x70] sm:$0xf]
    %v1170 = vld [vmem:[#allocation8 + $0x74] sm:$0xf]
    %v1171 = vld [vmem:[#allocation8 + $0x78] sm:$0xf]
    %v1172 = vld [vmem:[#allocation8 + $0x7c] sm:$0xf]
    %v1173 = vld [vmem:[#allocation8 + $0x80] sm:$0xf]
    %v1174 = vld [vmem:[#allocation8 + $0x84] sm:$0xf]
    %v1175 = vld [vmem:[#allocation8 + $0x88] sm:$0xf]
    %v1176 = vld [vmem:[#allocation8 + $0x8c] sm:$0xf]
    %v1177 = vld [vmem:[#allocation8 + $0x90] sm:$0xf]
    %v1178 = vld [vmem:[#allocation8 + $0x94] sm:$0xf]
    %v1179 = vld [vmem:[#allocation8 + $0x98] sm:$0xf]
    %v1180 = vld [vmem:[#allocation8 + $0x9c] sm:$0xf]
    %v1181 = vld [vmem:[#allocation8 + $0xa0] sm:$0xf]
    %v1182 = vld [vmem:[#allocation8 + $0xa4] sm:$0xf]
    %v1183 = vld [vmem:[#allocation8 + $0xa8] sm:$0xf]
    %v1184 = vld [vmem:[#allocation8 + $0xac] sm:$0xf]
    %v1185 = vld [vmem:[#allocation8 + $0xb0] sm:$0xf]
    %v1186 = vld [vmem:[#allocation8 + $0xb4] sm:$0xf]
    %v1187 = vld [vmem:[#allocation8 + $0xb8] sm:$0xf]
    %v1188 = vld [vmem:[#allocation8 + $0xbc] sm:$0xf]
    %v1237 = vunpack.c.l.b16 %v1141
    %v1238 = vunpack.c.l.b16 %v1142
    %v1239 = vunpack.c.l.b16 %v1143
    %v1240 = vunpack.c.l.b16 %v1144
    %v1241 = vunpack.c.l.b16 %v1145
    %v1242 = vunpack.c.l.b16 %v1146
    %v1243 = vunpack.c.l.b16 %v1147
    %v1244 = vunpack.c.l.b16 %v1148
    %v1245 = vunpack.c.l.b16 %v1149
    %v1246 = vunpack.c.l.b16 %v1150
    %v1247 = vunpack.c.l.b16 %v1151
    %v1248 = vunpack.c.l.b16 %v1152
    %v1249 = vunpack.c.l.b16 %v1153
    %v1250 = vunpack.c.l.b16 %v1154
    %v1251 = vunpack.c.l.b16 %v1155
    %v1252 = vunpack.c.l.b16 %v1156
    %v1253 = vunpack.c.l.b16 %v1157
    %v1254 = vunpack.c.l.b16 %v1158
    %v1255 = vunpack.c.l.b16 %v1159
    %v1256 = vunpack.c.l.b16 %v1160
    %v1257 = vunpack.c.l.b16 %v1161
    %v1258 = vunpack.c.l.b16 %v1162
    %v1259 = vunpack.c.l.b16 %v1163
    %v1260 = vunpack.c.l.b16 %v1164
    %v1261 = vunpack.c.l.b16 %v1165
    %v1262 = vunpack.c.l.b16 %v1166
    %v1263 = vunpack.c.l.b16 %v1167
    %v1264 = vunpack.c.l.b16 %v1168
    %v1265 = vunpack.c.l.b16 %v1169
    %v1266 = vunpack.c.l.b16 %v1170
    %v1267 = vunpack.c.l.b16 %v1171
    %v1268 = vunpack.c.l.b16 %v1172
    %v1269 = vunpack.c.l.b16 %v1173
    %v1270 = vunpack.c.l.b16 %v1174
    %v1271 = vunpack.c.l.b16 %v1175
    %v1272 = vunpack.c.l.b16 %v1176
    %v1273 = vunpack.c.l.b16 %v1177
    %v1274 = vunpack.c.l.b16 %v1178
    %v1275 = vunpack.c.l.b16 %v1179
    %v1276 = vunpack.c.l.b16 %v1180
    %v1277 = vunpack.c.l.b16 %v1181
    %v1278 = vunpack.c.l.b16 %v1182
    %v1279 = vunpack.c.l.b16 %v1183
    %v1280 = vunpack.c.l.b16 %v1184
    %v1281 = vunpack.c.l.b16 %v1185
    %v1282 = vunpack.c.l.b16 %v1186
    %v1283 = vunpack.c.l.b16 %v1187
    %v1284 = vunpack.c.l.b16 %v1188
    %v1285 = vpack.c.b16 %v1238, %v1237
    %v1286 = vpack.c.b16 %v1240, %v1239
    %v1287 = vpack.c.b16 %v1242, %v1241
    %v1288 = vpack.c.b16 %v1244, %v1243
    %v1289 = vpack.c.b16 %v1246, %v1245
    %v1290 = vpack.c.b16 %v1248, %v1247
    %v1291 = vpack.c.b16 %v1250, %v1249
    %v1292 = vpack.c.b16 %v1252, %v1251
    %v1293 = vpack.c.b16 %v1254, %v1253
    %v1294 = vpack.c.b16 %v1256, %v1255
    %v1295 = vpack.c.b16 %v1258, %v1257
    %v1296 = vpack.c.b16 %v1260, %v1259
    %v1297 = vpack.c.b16 %v1262, %v1261
    %v1298 = vpack.c.b16 %v1264, %v1263
    %v1299 = vpack.c.b16 %v1266, %v1265
    %v1300 = vpack.c.b16 %v1268, %v1267
    %v1301 = vpack.c.b16 %v1270, %v1269
    %v1302 = vpack.c.b16 %v1272, %v1271
    %v1303 = vpack.c.b16 %v1274, %v1273
    %v1304 = vpack.c.b16 %v1276, %v1275
    %v1305 = vpack.c.b16 %v1278, %v1277
    %v1306 = vpack.c.b16 %v1280, %v1279
    %v1307 = vpack.c.b16 %v1282, %v1281
    %v1308 = vpack.c.b16 %v1284, %v1283
    %1333 = vmatprep.subr.bf16.mxu0 0
    %1334 = vmatpush1.bf16.msra.mxu0 %v1285
    %1335 = vmatprep.subr.bf16.mxu0 0
    %1336 = vmatpush1.bf16.msra.mxu0 %v1286
    %1337 = vmatprep.subr.bf16.mxu0 0
    %1338 = vmatpush1.bf16.msra.mxu0 %v1287
    %1339 = vmatprep.subr.bf16.mxu0 0
    %1340 = vmatpush1.bf16.msra.mxu0 %v1288
    %1341 = vmatprep.subr.bf16.mxu0 0
    %1342 = vmatpush1.bf16.msra.mxu0 %v1289
    %1343 = vmatprep.subr.bf16.mxu0 0
    %1344 = vmatpush1.bf16.msra.mxu0 %v1290
    %1345 = vmatprep.subr.bf16.mxu0 0
    %1346 = vmatpush1.bf16.msra.mxu0 %v1291
    %1347 = vmatprep.subr.bf16.mxu0 0
    %1348 = vmatpush1.bf16.msra.mxu0 %v1292
    %1349 = vmatprep.subr.bf16.mxu0 0
    %1350 = vmatpush1.bf16.msra.mxu0 %v1293
    %1351 = vmatprep.subr.bf16.mxu0 0
    %1352 = vmatpush1.bf16.msra.mxu0 %v1294
    %1353 = vmatprep.subr.bf16.mxu0 0
    %1354 = vmatpush1.bf16.msra.mxu0 %v1295
    %1355 = vmatprep.subr.bf16.mxu0 0
    %1356 = vmatpush1.bf16.msra.mxu0 %v1296
    %1357 = vmatprep.subr.bf16.mxu0 0
    %1358 = vmatpush1.bf16.msra.mxu0 %v1297
    %1359 = vmatprep.subr.bf16.mxu0 0
    %1360 = vmatpush1.bf16.msra.mxu0 %v1298
    %1361 = vmatprep.subr.bf16.mxu0 0
    %1362 = vmatpush1.bf16.msra.mxu0 %v1299
    %1363 = vmatprep.subr.bf16.mxu0 0
    %1364 = vmatpush1.bf16.msra.mxu0 %v1300
    %1365 = vmatprep.mubr.bf16.mxu0 %v1129
    %1366 = vmatmul.mubr.bf16.gmra.mrb[0].mxu0 %v1121
    %v1367 = vpop.f32.mrb[0].mxu0
    %v1368 = vadd.f32 0.0, %v1367
    %v1369 = vpop.f32.mrb[0].mxu0
    %v1370 = vpop.f32.mrb[0].mxu0
    %v1371 = vadd.f32 0.0, %v1370
    %v1372 = vpop.f32.mrb[0].mxu0
    %1373 = vmatprep.mubr.bf16.mxu0 %v1130
    %1374 = vmatmul.mubr.bf16.gmra.mrb[0].mxu0 %v1122
    %v1375 = vpop.f32.mrb[0].mxu0
    %v1376 = vadd.f32 0.0, %v1375
    %v1377 = vpop.f32.mrb[0].mxu0
    %v1378 = vpop.f32.mrb[0].mxu0
    %v1379 = vadd.f32 0.0, %v1378
    %v1380 = vpop.f32.mrb[0].mxu0
    %1381 = vdwg.mxu0
    %1382 = vmatprep.subr.bf16.mxu0 0
    %1383 = vmatpush1.bf16.msra.mxu0 %v1301
    %1384 = vmatprep.subr.bf16.mxu0 0
    %1385 = vmatpush1.bf16.msra.mxu0 %v1302
    %1386 = vmatprep.subr.bf16.mxu0 0
    %1387 = vmatpush1.bf16.msra.mxu0 %v1303
    %1388 = vmatprep.subr.bf16.mxu0 0
    %1389 = vmatpush1.bf16.msra.mxu0 %v1304
    %1390 = vmatprep.subr.bf16.mxu0 0
    %1391 = vmatpush1.bf16.msra.mxu0 %v1305
    %1392 = vmatprep.subr.bf16.mxu0 0
    %1393 = vmatpush1.bf16.msra.mxu0 %v1306
    %1394 = vmatprep.subr.bf16.mxu0 0
    %1395 = vmatpush1.bf16.msra.mxu0 %v1307
    %1396 = vmatprep.subr.bf16.mxu0 0
    %1397 = vmatpush1.bf16.msra.mxu0 %v1308
    %1398 = vmatprep.subr.bf16.mxu0 0
    %1399 = vmatpush1.bf16.msra.mxu0 0
    %1400 = vmatprep.subr.bf16.mxu0 0
    %1401 = vmatpush1.bf16.msra.mxu0 0
    %1402 = vmatprep.subr.bf16.mxu0 0
    %1403 = vmatpush1.bf16.msra.mxu0 0
    %1404 = vmatprep.subr.bf16.mxu0 0
    %1405 = vmatpush1.bf16.msra.mxu0 0
    %1406 = vmatprep.subr.bf16.mxu0 0
    %1407 = vmatpush1.bf16.msra.mxu0 0
    %1408 = vmatprep.subr.bf16.mxu0 0
    %1409 = vmatpush1.bf16.msra.mxu0 0
    %1410 = vmatprep.subr.bf16.mxu0 0
    %1411 = vmatpush1.bf16.msra.mxu0 0
    %1412 = vmatprep.subr.bf16.mxu0 0
    %1413 = vmatpush1.bf16.msra.mxu0 0
    %1414 = vmatprep.mubr.bf16.mxu0 0
    %1415 = vmatmul.mubr.bf16.gmra.mrb[0].mxu0 %v1137
    %v1416 = vpop.f32.mrb[0].mxu0
    %v1417 = vadd.f32 %v1368, %v1416
    %v1418 = vpop.f32.mrb[0].mxu0
    %v1419 = vpop.f32.mrb[0].mxu0
    %v1420 = vadd.f32 %v1371, %v1419
    %v1421 = vpop.f32.mrb[0].mxu0
    %1422 = vmatprep.mubr.bf16.mxu0 0
    %1423 = vmatmul.mubr.bf16.gmra.mrb[0].mxu0 %v1138
    %v1424 = vpop.f32.mrb[0].mxu0
    %v1425 = vadd.f32 %v1376, %v1424
    %v1426 = vpop.f32.mrb[0].mxu0
    %v1427 = vpop.f32.mrb[0].mxu0
    %v1428 = vadd.f32 %v1379, %v1427
    %v1429 = vpop.f32.mrb[0].mxu0
    %1430 = vdwg.mxu0
    %v1431 = vld [vmem:[%s5] sm:$0x1]
    %v1432 = vld [vmem:[%s6] sm:$0x1]
    %v1433 = vadd.f32 %v1417, %v1420
    %v1434 = vadd.f32 %v1433, %v1425
    %v1435 = vadd.f32 %v1434, %v1428
    %v1436 = vrot.slane %v1435, 4
    %v1437 = vadd.f32 %v1435, %v1436
    %v1438 = vrot.slane %v1437, 2
    %v1439 = vadd.f32 %v1437, %v1438
    %v1440 = vrot.slane %v1439, 1
    %v1441 = vadd.f32 %v1439, %v1440
    %v1442 = vmul.f32 %v1417, %v1417
    %v1443 = vmul.f32 %v1420, %v1420
    %v1444 = vmul.f32 %v1425, %v1425
    %v1445 = vmul.f32 %v1428, %v1428
    %v1446 = vadd.f32 %v1442, %v1443
    %v1447 = vadd.f32 %v1446, %v1444
    %v1448 = vadd.f32 %v1447, %v1445
    %v1449 = vrot.slane %v1448, 4
    %v1450 = vadd.f32 %v1448, %v1449
    %v1451 = vrot.slane %v1450, 2
    %v1452 = vadd.f32 %v1450, %v1451
    %v1453 = vrot.slane %v1452, 1
    %v1454 = vadd.f32 %v1452, %v1453
    %v1455 = vsel %vm853, %v1441, %v1454
    %1456 = vmatprep.subr.mxu0 0.0
    %1457 = vmatpush1.msra.mxu0 %v324
    %1458 = vmatprep.subr.mxu0 0.0
    %1459 = vmatpush1.msra.mxu0 %v325
    %1460 = vmatprep.subr.mxu0 0.0
    %1461 = vmatpush1.msra.mxu0 %v326
    %1462 = vmatprep.subr.mxu0 0.0
    %1463 = vmatpush1.msra.mxu0 %v327
    %1464 = vmatprep.subr.mxu0 0.0
    %1465 = vmatpush1.msra.mxu0 %v328
    %1466 = vmatprep.subr.mxu0 0.0
    %1467 = vmatpush1.msra.mxu0 %v329
    %1468 = vmatprep.subr.mxu0 0.0
    %1469 = vmatpush1.msra.mxu0 %v330
    %1470 = vmatprep.subr.mxu0 0.0
    %1471 = vmatpush1.msra.mxu0 %v331
    %1472 = vmatprep.subr.mxu0 0.0
    %1473 = vmatpush1.msra.mxu0 %v332
    %1474 = vmatprep.subr.mxu0 0.0
    %1475 = vmatpush1.msra.mxu0 %v333
    %1476 = vmatprep.subr.mxu0 0.0
    %1477 = vmatpush1.msra.mxu0 %v334
    %1478 = vmatprep.subr.mxu0 0.0
    %1479 = vmatpush1.msra.mxu0 %v335
    %1480 = vmatprep.subr.mxu0 0.0
    %1481 = vmatpush1.msra.mxu0 %v336
    %1482 = vmatprep.subr.mxu0 0.0
    %1483 = vmatpush1.msra.mxu0 %v337
    %1484 = vmatprep.subr.mxu0 0.0
    %1485 = vmatpush1.msra.mxu0 %v338
    %1486 = vmatprep.subr.mxu0 0.0
    %1487 = vmatpush1.msra.mxu0 %v339
    %1488 = vmatprep.subr.mxu0 0.0
    %1489 = vmatpush1.msra.mxu0 0.0
    %1490 = vmatprep.subr.mxu0 0.0
    %1491 = vmatpush1.msra.mxu0 0.0
    %1492 = vmatprep.subr.mxu0 0.0
    %1493 = vmatpush1.msra.mxu0 0.0
    %1494 = vmatprep.subr.mxu0 0.0
    %1495 = vmatpush1.msra.mxu0 0.0
    %1496 = vmatprep.subr.mxu0 0.0
    %1497 = vmatpush1.msra.mxu0 0.0
    %1498 = vmatprep.subr.mxu0 0.0
    %1499 = vmatpush1.msra.mxu0 0.0
    %1500 = vmatprep.subr.mxu0 0.0
    %1501 = vmatpush1.msra.mxu0 0.0
    %1502 = vmatprep.subr.mxu0 0.0
    %1503 = vmatpush1.msra.mxu0 0.0
    %1504 = vmatprep.subr.mxu0 0.0
    %1505 = vmatpush1.msra.mxu0 0.0
    %1506 = vmatprep.subr.mxu0 0.0
    %1507 = vmatpush1.msra.mxu0 0.0
    %1508 = vmatprep.subr.mxu0 0.0
    %1509 = vmatpush1.msra.mxu0 0.0
    %1510 = vmatprep.subr.mxu0 0.0
    %1511 = vmatpush1.msra.mxu0 0.0
    %1512 = vmatprep.subr.mxu0 0.0
    %1513 = vmatpush1.msra.mxu0 0.0
    %1514 = vmatprep.subr.mxu0 0.0
    %1515 = vmatpush1.msra.mxu0 0.0
    %1516 = vmatprep.subr.mxu0 0.0
    %1517 = vmatpush1.msra.mxu0 0.0
    %1518 = vmatprep.subr.mxu0 0.0
    %1519 = vmatpush1.msra.mxu0 0.0
    %1520 = vmatprep.mubr.f32.mxu0 0.0
    %1521 = vmatmul.mubr.f32.gmra.mrb[0].mxu0 %v1455
    %v1522 = vpop.f32.mrb[0].mxu0
    %v1523 = vadd.f32 0.0, %v1522
    %v1524 = vpop.f32.mrb[0].mxu0
    %1525 = vdwg.mxu0
    %v1526 = vmul.f32 %v1523, 0.001953125
    %v1527 = vmul.f32 %v1526, %v1526
    %v1529 = vrot.slane %v1527, 7
    %v1531 = vsub.f32 %v1526, %v1529
    %v1532 = vmax.f32 %v1531, 0.0
    %v1533 = vlaneseq
    %v1534 = vshrl.u32 %v1533, 7
    %v1535 = vsub.s32 0, %v1534
    %v1536 = vrot.slane %v1526, %v1535
    %v1537 = vsub.f32 %v1417, %v1536
    %v1538 = vsub.f32 %v1420, %v1536
    %v1539 = vsub.f32 %v1425, %v1536
    %v1540 = vsub.f32 %v1428, %v1536
    %v1541 = vadd.f32 %v1532, 1e-05
    %v1542 = vrsqrt.pop %v1541
    %v1543 = vlaneseq
    %v1544 = vshrl.u32 %v1543, 7
    %v1545 = vsub.s32 1, %v1544
    %v1546 = vrot.slane %v1542, %v1545
    %v1547 = vmul.f32 %v1537, %v1546
    %v1548 = vmul.f32 %v1538, %v1546
    %v1549 = vmul.f32 %v1539, %v1546
    %v1550 = vmul.f32 %v1540, %v1546
    %v1552 = vlaneseq
    %v1553 = vshrl.u32 %v1552, 7
    %v1554 = vsub.s32 0, %v1553
    %v1555 = vrot.slane %v1431, %v1554
    %v1557 = vmul.f32 %v1547, %v1555
    %v1558 = vmul.f32 %v1548, %v1555
    %v1559 = vmul.f32 %v1549, %v1555
    %v1560 = vmul.f32 %v1550, %v1555
    %v1562 = vlaneseq
    %v1563 = vshrl.u32 %v1562, 7
    %v1564 = vsub.s32 0, %v1563
    %v1565 = vrot.slane %v1432, %v1564
    %v1567 = vadd.f32 %v1557, %v1565
    %v1568 = vadd.f32 %v1558, %v1565
    %v1569 = vadd.f32 %v1559, %v1565
    %v1570 = vadd.f32 %v1560, %v1565
    %v1571 = vld [vmem:[#allocation3] sm:$0xff]
    %v1572 = vld [vmem:[#allocation3 + $0x8] sm:$0xff]
    %v1573 = vld [vmem:[#allocation3 + $0x10] sm:$0xff]
    %v1574 = vld [vmem:[#allocation3 + $0x18] sm:$0xff]
    %v1575 = vadd.f32 %v1567, %v1571
    %v1576 = vadd.f32 %v1568, %v1572
    %v1577 = vadd.f32 %v1569, %v1573
    %v1578 = vadd.f32 %v1570, %v1574
    %v1579 = vmax.f32 %v1575, 0.0
    %v1580 = vmax.f32 %v1576, 0.0
    %v1581 = vmax.f32 %v1577, 0.0
    %v1582 = vmax.f32 %v1578, 0.0
    %1583 = vst [vmem:[#allocation9] sm:$0xff] %v1579
    %1584 = vst [vmem:[#allocation9 + $0x8] sm:$0xff] %v1580
    %1585 = vst [vmem:[#allocation9 + $0x10] sm:$0xff] %v1581
    %1586 = vst [vmem:[#allocation9 + $0x18] sm:$0xff] %v1582
    // Predicated region
    $region42: #{tpu_custom_call.1} parent=1 // pred_check
      _
    $region43: #{tpu_custom_call.1} parent=1 // pred_check_branch
      %1588 = sbr.rel (0) target = $region45
    $region44: #{tpu_custom_call.1} parent=1 // pred_region
      %s1590 = ssub.s32 512, 512
      %1591 = vsyncadd [#allocation5], %s1590
      %s1592 = sshll.u32 [#allocation9], 4
      %s1593 = int_to_ptr.vmem [resolvable:$true] %s1592
      %1598 = dma.vmem_to_hbm [thread:$0]  %s1593, 512, %s7, [#allocation5], 128, 128, 8
    $region45: #{tpu_custom_call.1} parent=1 // pred_fallthru
      _
    // Predicated region
    $region46: #{tpu_custom_call.1} parent=1 // pred_check
      _
    $region47: #{tpu_custom_call.1} parent=1 // pred_check_branch
      %1600 = sbr.rel (0) target = $region49
    $region48: #{tpu_custom_call.1} parent=1 // pred_region
      %1601 = dma.done [#allocation5], 512
    $region49: #{tpu_custom_call.1} parent=1 // pred_fallthru
      _
    %1602 = vsyncpa [#allocation4], 1
    %1603 = vsyncpa [#allocation7], 1
    %1604 = vsyncpa [#allocation5], 1

</llo_original>
